<compile_context>
chip_gen: v6e
topology: v6e:2x2x1
jax: 0.10.0
libtpu: 0.0.40
codegen_flags: <defaults>
</compile_context>

<pallas_src>
import jax
import jax.numpy as jnp
from jax.experimental import pallas as pl
from jax.experimental.pallas import tpu as pltpu

BN_EPS = 1e-5


def _round_up(x, m):
    return (x + m - 1) // m * m


def pos_embed_kernel(x_ref, w1_ref, b1_ref, w2_ref, b2_ref, o_ref):
    # x_ref : (1, Cin, tn) f32   streamed x^T tile (points on the lane axis)
    # w1_ref: (F, Cin)     f32   conv1 weight with BN scale folded in (VMEM-resident)
    # b1_ref: (F, 1)       f32   folded BN shift (conv1 bias cancels under train-mode BN)
    # w2_ref: (F, F)       bf16  conv2 weight, used as-is (out^T = W2 @ h^T)     (resident)
    # b2_ref: (F, 1)       f32   conv2 bias                                      (resident)
    # o_ref : (1, F, tn)   bf16  output tile, written directly in (B, F, N) layout
    cin = x_ref.shape[1]
    xt = x_ref[0]                                        # (Cin, tn) f32

    # conv1 (+ folded BN scale) on the VPU: Cin is tiny (3), so an unrolled outer-product
    # accumulation avoids burning a full-depth MXU pass on a K=3 matmul (matters on v5e).
    acc = w1_ref[:, 0:1] * xt[0:1, :]                    # (F,1)*(1,tn) -> (F,tn)
    for c in range(1, cin):
        acc = acc + w1_ref[:, c:c + 1] * xt[c:c + 1, :]
    h = jnp.maximum(acc + b1_ref[...], 0.0)              # BN shift + ReLU, f32

    # conv2 on the MXU: bf16 operands, f32 accumulation, f32 bias add, bf16 store.
    out = jnp.dot(w2_ref[...], h.astype(jnp.bfloat16),
                  preferred_element_type=jnp.float32) + b2_ref[...]
    o_ref[0] = out.astype(o_ref.dtype)


def position_embedding_learned(xyz, params, *, tile_n=4096, out_dtype=jnp.bfloat16):
    """xyz: (B, N, C_in) float32. Returns (B, num_pos_feats, N) like the PyTorch module."""
    w1, b1, gamma, beta, w2, b2 = params
    del b1  # a per-channel constant added before train-mode BN is cancelled by mean subtraction
    B, N, Cin = xyz.shape
    F = w1.shape[0]
    M = B * N

    x2d = xyz.reshape(M, Cin).astype(jnp.float32)

    # --- Analytic BN fold (training-mode batch statistics over ALL B*N rows) ---
    #   mean_h = mean_x @ W1^T (+ b1)      var_h[c] = w1[c] @ Cov(x) @ w1[c]   (biased Cov)
    # so  BN(h) = h*scale + shift  with scale = gamma*rsqrt(var_h+eps),
    #                                  shift = beta - (mean_x @ W1^T)*scale   (b1 cancels)
    mean_x = jnp.mean(x2d, axis=0)                       # (Cin,)
    xc = x2d - mean_x
    cov_x = (xc.T @ xc) / M                              # (Cin, Cin), biased like PyTorch BN
    var_h = jnp.sum((w1 @ cov_x) * w1, axis=1)           # (F,)
    scale = gamma * jax.lax.rsqrt(var_h + BN_EPS)        # (F,)
    w1_eff = (w1 * scale[:, None]).astype(jnp.float32)   # (F, Cin) with BN scale folded in
    b1_eff = (beta - (mean_x @ w1.T) * scale).reshape(F, 1).astype(jnp.float32)

    # --- Tiling: points (N) on the lane axis so the kernel emits (B, F, N) directly ---
    n_lane = _round_up(N, 128)                           # lane alignment -> unmasked stores
    grid_n = pl.cdiv(n_lane, min(tile_n, n_lane))
    tn = _round_up(pl.cdiv(n_lane, grid_n), 128)         # balanced, 128-aligned tile width
    n_pad = grid_n * tn

    # Input-side transpose/pad is tiny (12 B/point) vs the 512 B/point output; the PyTorch
    # module performs this same (B,N,C)->(B,C,N) transpose internally anyway.
    xt = jnp.pad(xyz.astype(jnp.float32).transpose(0, 2, 1),
                 ((0, 0), (0, 0), (0, n_pad - N)))       # (B, Cin, n_pad)
    w2_b = w2.astype(jnp.bfloat16)
    b2_2 = b2.reshape(F, 1).astype(jnp.float32)

    out = pl.pallas_call(
        pos_embed_kernel,
        out_shape=jax.ShapeDtypeStruct((B, F, n_pad), out_dtype),
        grid=(B, grid_n),
        in_specs=[
            pl.BlockSpec((1, Cin, tn), lambda b, j: (b, 0, j)),   # streamed x^T tiles
            pl.BlockSpec((F, Cin), lambda b, j: (0, 0)),          # resident
            pl.BlockSpec((F, 1), lambda b, j: (0, 0)),            # resident
            pl.BlockSpec((F, F), lambda b, j: (0, 0)),            # resident
            pl.BlockSpec((F, 1), lambda b, j: (0, 0)),            # resident
        ],
        out_specs=pl.BlockSpec((1, F, tn), lambda b, j: (b, 0, j)),
        compiler_params=pltpu.CompilerParams(
            dimension_semantics=("parallel", "parallel"),   # shard (batch, N-tiles) across TCs
            vmem_limit_bytes=32 * 1024 * 1024,              # ~20 MiB peak at tn=4096
        ),
    )(xt, w1_eff, b1_eff, w2_b, b2_2)

    # Only sliced when N was not already tile-aligned (common point-cloud sizes need no slice).
    return out if n_pad == N else out[:, :, :N]


def init_params(key, input_channel=3, num_pos_feats=256):
    k1, k2, k3, k4 = jax.random.split(key, 4)
    w1 = jax.random.normal(k1, (num_pos_feats, input_channel), jnp.float32) * 0.1
    b1 = jax.random.normal(k2, (num_pos_feats,), jnp.float32) * 0.01
    gamma = jnp.ones((num_pos_feats,), jnp.float32)
    beta = jnp.zeros((num_pos_feats,), jnp.float32)
    w2 = jax.random.normal(k3, (num_pos_feats, num_pos_feats), jnp.float32) * 0.05
    b2 = jax.random.normal(k4, (num_pos_feats,), jnp.float32) * 0.01
    return (w1, b1, gamma, beta, w2, b2)


def _reference(xyz, params):
    """Plain-JAX f32 reference of the PyTorch forward (training-mode BN, b1 included)."""
    w1, b1, gamma, beta, w2, b2 = params
    B, N, Cin = xyz.shape
    F = w1.shape[0]
    x = xyz.reshape(B * N, Cin)
    h = x @ w1.T + b1
    mean = jnp.mean(h, axis=0, keepdims=True)
    var = jnp.mean((h - mean) ** 2, axis=0, keepdims=True)
    h = (h - mean) / jnp.sqrt(var + BN_EPS) * gamma + beta
    h = jnp.maximum(h, 0.0)
    out = h @ w2.T + b2
    return out.reshape(B, N, F).transpose(0, 2, 1)


if __name__ == "__main__":
    key = jax.random.PRNGKey(0)
    k_x, k_p = jax.random.split(key)

    B, N, C_in, F = 2, 16, 3, 256
    xyz = jax.random.normal(k_x, (B, N, C_in), jnp.float32)  # (batch, num_points, 3)
    params = init_params(k_p, input_channel=C_in, num_pos_feats=F)

    fwd = jax.jit(position_embedding_learned, static_argnames=("tile_n", "out_dtype"))
    out = jax.block_until_ready(fwd(xyz, params))

    ref = _reference(xyz, params)
    assert out.shape == (B, F, N), out.shape
    max_err = float(jnp.max(jnp.abs(out.astype(jnp.float32) - ref)))
    # conv2 uses bf16 MXU operands (f32 accumulation) and the output is stored in bf16,
    # so allow small rounding vs the pure-f32 reference.
    assert max_err < 3e-2, max_err
    # TODO(synk): eval-mode BatchNorm (running stats) is not implemented; this matches train mode.
    print("KERNEL_OK")
</pallas_src>

<mosaic_0001>
module attributes {stable_mosaic.version = 11 : i64} {
  func.func @pos_embed_kernel(%arg0: i32, %arg1: i32, %arg2: memref<1x3x128xf32, #tpu.memory_space<vmem>>, %arg3: memref<256x3xf32, #tpu.memory_space<vmem>>, %arg4: memref<256x1xf32, #tpu.memory_space<vmem>>, %arg5: memref<256x256xbf16, #tpu.memory_space<vmem>>, %arg6: memref<256x1xf32, #tpu.memory_space<vmem>>, %arg7: memref<1x256x128xbf16, #tpu.memory_space<vmem>>) attributes {dimension_semantics = [#tpu.dimension_semantics<parallel>, #tpu.dimension_semantics<parallel>], iteration_bounds = array<i64: 2, 1>, scalar_prefetch = 0 : i64, scratch_operands = 0 : i64, tpu.core_type = #tpu.core_type<tc>, window_params = [{transform_indices = @transform_0, window_bounds = array<i64: 1, 3, 128>}, {pipeline_mode = #tpu.pipeline_mode<synchronous>, transform_indices = @transform_1, window_bounds = array<i64: 256, 3>}, {pipeline_mode = #tpu.pipeline_mode<synchronous>, transform_indices = @transform_2, window_bounds = array<i64: 256, 1>}, {pipeline_mode = #tpu.pipeline_mode<synchronous>, transform_indices = @transform_3, window_bounds = array<i64: 256, 256>}, {pipeline_mode = #tpu.pipeline_mode<synchronous>, transform_indices = @transform_4, window_bounds = array<i64: 256, 1>}, {transform_indices = @transform_5, window_bounds = array<i64: 1, 256, 128>}]} {
    %c0 = arith.constant 0 : index
    %c0_0 = arith.constant 0 : index
    %c0_1 = arith.constant 0 : index
    %0 = vector.load %arg2[%c0, %c0_0, %c0_1] : memref<1x3x128xf32, #tpu.memory_space<vmem>>, vector<1x3x128xf32>
    %1 = vector.shape_cast %0 : vector<1x3x128xf32> to vector<3x128xf32>
    %c0_2 = arith.constant 0 : index
    %c0_3 = arith.constant 0 : index
    %2 = vector.load %arg3[%c0_2, %c0_3] : memref<256x3xf32, #tpu.memory_space<vmem>>, vector<256x1xf32>
    %3 = vector.extract_strided_slice %1 {offsets = [0, 0], sizes = [1, 128], strides = [1, 1]} : vector<3x128xf32> to vector<1x128xf32>
    %4 = vector.broadcast %2 : vector<256x1xf32> to vector<256x128xf32>
    %5 = vector.broadcast %3 : vector<1x128xf32> to vector<256x128xf32>
    %6 = arith.mulf %4, %5 : vector<256x128xf32>
    %c0_4 = arith.constant 0 : index
    %c1 = arith.constant 1 : index
    %7 = vector.load %arg3[%c0_4, %c1] : memref<256x3xf32, #tpu.memory_space<vmem>>, vector<256x1xf32>
    %8 = vector.extract_strided_slice %1 {offsets = [1, 0], sizes = [1, 128], strides = [1, 1]} : vector<3x128xf32> to vector<1x128xf32>
    %9 = vector.broadcast %7 : vector<256x1xf32> to vector<256x128xf32>
    %10 = vector.broadcast %8 : vector<1x128xf32> to vector<256x128xf32>
    %11 = arith.mulf %9, %10 : vector<256x128xf32>
    %12 = arith.addf %6, %11 : vector<256x128xf32>
    %c0_5 = arith.constant 0 : index
    %c2 = arith.constant 2 : index
    %13 = vector.load %arg3[%c0_5, %c2] : memref<256x3xf32, #tpu.memory_space<vmem>>, vector<256x1xf32>
    %14 = vector.extract_strided_slice %1 {offsets = [2, 0], sizes = [1, 128], strides = [1, 1]} : vector<3x128xf32> to vector<1x128xf32>
    %15 = vector.broadcast %13 : vector<256x1xf32> to vector<256x128xf32>
    %16 = vector.broadcast %14 : vector<1x128xf32> to vector<256x128xf32>
    %17 = arith.mulf %15, %16 : vector<256x128xf32>
    %18 = arith.addf %12, %17 : vector<256x128xf32>
    %c0_6 = arith.constant 0 : index
    %c0_7 = arith.constant 0 : index
    %19 = vector.load %arg4[%c0_6, %c0_7] : memref<256x1xf32, #tpu.memory_space<vmem>>, vector<256x1xf32>
    %20 = vector.broadcast %19 : vector<256x1xf32> to vector<256x128xf32>
    %21 = arith.addf %18, %20 : vector<256x128xf32>
    %cst = arith.constant 0.000000e+00 : f32
    %22 = vector.broadcast %cst : f32 to vector<256x128xf32>
    %23 = arith.maximumf %21, %22 : vector<256x128xf32>
    %c0_8 = arith.constant 0 : index
    %c0_9 = arith.constant 0 : index
    %24 = vector.load %arg5[%c0_8, %c0_9] : memref<256x256xbf16, #tpu.memory_space<vmem>>, vector<256x256xbf16>
    %25 = arith.truncf %23 : vector<256x128xf32> to vector<256x128xbf16>
    %cst_10 = arith.constant dense<0.000000e+00> : vector<256x128xf32>
    %26 = tpu.matmul %24, %25, %cst_10 {dimension_numbers = #tpu.dot_dimension_numbers<[1], [0], [0], [1], [0, 0, 1, 1], [], []>} : vector<256x256xbf16>, vector<256x128xbf16>, vector<256x128xf32> -> vector<256x128xf32>
    %c0_11 = arith.constant 0 : index
    %c0_12 = arith.constant 0 : index
    %27 = vector.load %arg6[%c0_11, %c0_12] : memref<256x1xf32, #tpu.memory_space<vmem>>, vector<256x1xf32>
    %28 = vector.broadcast %27 : vector<256x1xf32> to vector<256x128xf32>
    %29 = arith.addf %26, %28 : vector<256x128xf32>
    %30 = arith.truncf %29 : vector<256x128xf32> to vector<256x128xbf16>
    %c0_13 = arith.constant 0 : index
    %c0_14 = arith.constant 0 : index
    %c0_15 = arith.constant 0 : index
    %31 = vector.load %arg7[%c0_13, %c0_14, %c0_15] : memref<1x256x128xbf16, #tpu.memory_space<vmem>>, vector<1x256x128xbf16>
    %32 = vector.shape_cast %31 : vector<1x256x128xbf16> to vector<256x128xbf16>
    %33 = vector.shape_cast %30 : vector<256x128xbf16> to vector<1x256x128xbf16>
    tpu.vector_store %arg7[%c0_13, %c0_14, %c0_15], %33 {strides = array<i32>} : memref<1x256x128xbf16, #tpu.memory_space<vmem>>, vector<1x256x128xbf16>,
    return
  }
  func.func @transform_0(%arg0: i32, %arg1: i32) -> (i32, i32, i32) {
    %c0_i32 = arith.constant 0 : i32
    %c0_i32_0 = arith.constant 0 : i32
    return %arg0, %c0_i32, %arg1 : i32, i32, i32
  }
  func.func @transform_1(%arg0: i32, %arg1: i32) -> (i32, i32) {
    %c0_i32 = arith.constant 0 : i32
    %c0_i32_0 = arith.constant 0 : i32
    %c0_i32_1 = arith.constant 0 : i32
    return %c0_i32, %c0_i32_0 : i32, i32
  }
  func.func @transform_2(%arg0: i32, %arg1: i32) -> (i32, i32) {
    %c0_i32 = arith.constant 0 : i32
    %c0_i32_0 = arith.constant 0 : i32
    %c0_i32_1 = arith.constant 0 : i32
    return %c0_i32, %c0_i32_0 : i32, i32
  }
  func.func @transform_3(%arg0: i32, %arg1: i32) -> (i32, i32) {
    %c0_i32 = arith.constant 0 : i32
    %c0_i32_0 = arith.constant 0 : i32
    %c0_i32_1 = arith.constant 0 : i32
    return %c0_i32, %c0_i32_0 : i32, i32
  }
  func.func @transform_4(%arg0: i32, %arg1: i32) -> (i32, i32) {
    %c0_i32 = arith.constant 0 : i32
    %c0_i32_0 = arith.constant 0 : i32
    %c0_i32_1 = arith.constant 0 : i32
    return %c0_i32, %c0_i32_0 : i32, i32
  }
  func.func @transform_5(%arg0: i32, %arg1: i32) -> (i32, i32, i32) {
    %c0_i32 = arith.constant 0 : i32
    %c0_i32_0 = arith.constant 0 : i32
    return %arg0, %c0_i32, %arg1 : i32, i32, i32
  }
}

</mosaic_0001>

<llo_original>
// kernel: position_embedding_learned.1
$region0: #{position_embedding_learned.1}
  #allocation0 [shape = 'u32[]', space=smem, size = 0x4, offset = 0x4, fixed_abs, tag = 'smem constant byte address 0x4 - core index']
  #allocation1 [shape = 'u32[144,128]{1,0:T(1,128)}', space=vmem, size = 0x12000, scoped, tag = 'internal scratch']
  %s0 = inlined_call_operand.vmem [shape: f32[2,3,128], index: 0, kind: input, shape index: {}]
  %s1 = inlined_call_operand.vmem [shape: f32[256,3], index: 1, kind: input, shape index: {}]
  %s2 = inlined_call_operand.vmem [shape: f32[256,1], index: 2, kind: input, shape index: {}]
  %s3 = inlined_call_operand.vmem [shape: bf16[256,256], index: 3, kind: input, shape index: {}]
  %s4 = inlined_call_operand.vmem [shape: f32[256,1], index: 4, kind: input, shape index: {}]
  %s5 = inlined_call_operand.vmem [shape: bf16[2,256,128], index: 5, kind: output, shape index: {}]
  %s6 = sld [smem:[#allocation0]]
  $region53: #{position_embedding_learned.1} parent=0
    _
  %s8 = ssub.s32 1, %s6
  %s9 = scalar_select 0, %s8, %s6
  loop: start=0, step=1, limit=4
  $region2: #{position_embedding_learned.1} parent=0 // loop_pre_header
    _
  $region3: #{position_embedding_learned.1} parent=0 // loop_header
    %s11 = sphi 0, %s15
    %p12 = scmp.ge.s32.totalorder %s11, 4
    %s18 = sphi 0, %s30
    %s19 = sphi 0, %s26
    %s20 = sphi 0, %s18
    %s21 = sphi 0, %s19
    %s22 = sphi 0, %s20
    %s23 = sphi 0, %s21
    %s35 = sphi 0, %s37
    %s38 = sphi 0, %s35
    %s39 = sphi 0, %s38
    %s55 = sphi 0, %s39
    %s59 = sphi 0, %s59
    %s61 = sphi 0, %s59
    %s62 = sphi 0, %s61
    %s76 = sphi 0, %s62
    %s80 = sphi 0, %s80
    %s82 = sphi 0, %s80
    %s83 = sphi 0, %s82
    %s97 = sphi 0, %s83
    %s101 = sphi 0, %s101
    %s103 = sphi 0, %s101
    %s104 = sphi 0, %s103
    %s118 = sphi 0, %s104
    %s122 = sphi 0, %s122
    %s124 = sphi 0, %s122
    %s125 = sphi 0, %s124
    %s139 = sphi 0, %s125
    %s147 = sphi 0, %s149
    %s150 = sphi 0, %s147
    %s151 = sphi 0, %s150
    %s167 = sphi 0, %s151
  $region4: #{position_embedding_learned.1} parent=0 // loop_header_branch
    %14 = sbr.rel (%p12) target = $region8
  $region5: #{position_embedding_learned.1} parent=0 // loop_body
    %s16 = ssub.s32 %s11, 1
    %s17 = ssub.s32 %s11, 2
    %s24 = sadd.s32 1, %s19
    %p25 = scmp.ge.s32.totalorder %s24, 1
    %s26 = scalar_select %p25, 0, %s24
    %s27 = sadd.s32 1, %s18
    %s28 = scalar_select %p25, %s27, %s18
    %p29 = scmp.ge.s32.totalorder %s28, 2
    %s30 = scalar_select %p29, 0, %s28
    %s31 = ssub.s32 %s18, %s30
    %s32 = ssub.s32 %s19, %s26
    %s33 = sor.u32 %s31, %s32
    %p34 = scmp.eq.s32.totalorder %s33, 0
    %s36 = sadd.s32 %s35, 1
    %s37 = scalar_select %p34, %s35, %s36
    %p40 = pneg %p34
    %p41 = scmp.eq.s32.totalorder %s11, 1
    %p42 = por %p40, %p41
    %p43 = scmp.ne.s32.totalorder %s35, %s38
    %p44 = scmp.eq.s32.totalorder %s11, 0
    %p45 = por %p43, %p44
    %p46 = scmp.ne.s32.totalorder %s35, %s38
    %p47 = scmp.eq.s32.totalorder %s16, 1
    %p48 = por %p46, %p47
    %p49 = scmp.ne.s32.totalorder %s38, %s39
    %p50 = scmp.eq.s32.totalorder %s16, 0
    %p51 = por %p49, %p50
    %p52 = scmp.ne.s32.totalorder %s38, %s39
    %p53 = scmp.eq.s32.totalorder %s17, 1
    %p54 = por %p52, %p53
    %p56 = scmp.ne.s32.totalorder %s39, %s55
    %p57 = scmp.eq.s32.totalorder %s17, 0
    %p58 = por %p56, %p57
    %s60 = sadd.s32 %s59, 1
    %p63 = scmp.eq.s32.totalorder %s11, 1
    %p64 = scmp.ne.s32.totalorder %s59, %s61
    %p65 = scmp.eq.s32.totalorder %s11, 0
    %p66 = por %p64, %p65
    %p67 = scmp.ne.s32.totalorder %s59, %s61
    %p68 = scmp.eq.s32.totalorder %s16, 1
    %p69 = por %p67, %p68
    %p70 = scmp.ne.s32.totalorder %s61, %s62
    %p71 = scmp.eq.s32.totalorder %s16, 0
    %p72 = por %p70, %p71
    %p73 = scmp.ne.s32.totalorder %s61, %s62
    %p74 = scmp.eq.s32.totalorder %s17, 1
    %p75 = por %p73, %p74
    %p77 = scmp.ne.s32.totalorder %s62, %s76
    %p78 = scmp.eq.s32.totalorder %s17, 0
    %p79 = por %p77, %p78
    %s81 = sadd.s32 %s80, 1
    %p84 = scmp.eq.s32.totalorder %s11, 1
    %p85 = scmp.ne.s32.totalorder %s80, %s82
    %p86 = scmp.eq.s32.totalorder %s11, 0
    %p87 = por %p85, %p86
    %p88 = scmp.ne.s32.totalorder %s80, %s82
    %p89 = scmp.eq.s32.totalorder %s16, 1
    %p90 = por %p88, %p89
    %p91 = scmp.ne.s32.totalorder %s82, %s83
    %p92 = scmp.eq.s32.totalorder %s16, 0
    %p93 = por %p91, %p92
    %p94 = scmp.ne.s32.totalorder %s82, %s83
    %p95 = scmp.eq.s32.totalorder %s17, 1
    %p96 = por %p94, %p95
    %p98 = scmp.ne.s32.totalorder %s83, %s97
    %p99 = scmp.eq.s32.totalorder %s17, 0
    %p100 = por %p98, %p99
    %s102 = sadd.s32 %s101, 1
    %p105 = scmp.eq.s32.totalorder %s11, 1
    %p106 = scmp.ne.s32.totalorder %s101, %s103
    %p107 = scmp.eq.s32.totalorder %s11, 0
    %p108 = por %p106, %p107
    %p109 = scmp.ne.s32.totalorder %s101, %s103
    %p110 = scmp.eq.s32.totalorder %s16, 1
    %p111 = por %p109, %p110
    %p112 = scmp.ne.s32.totalorder %s103, %s104
    %p113 = scmp.eq.s32.totalorder %s16, 0
    %p114 = por %p112, %p113
    %p115 = scmp.ne.s32.totalorder %s103, %s104
    %p116 = scmp.eq.s32.totalorder %s17, 1
    %p117 = por %p115, %p116
    %p119 = scmp.ne.s32.totalorder %s104, %s118
    %p120 = scmp.eq.s32.totalorder %s17, 0
    %p121 = por %p119, %p120
    %s123 = sadd.s32 %s122, 1
    %p126 = scmp.eq.s32.totalorder %s11, 1
    %p127 = scmp.ne.s32.totalorder %s122, %s124
    %p128 = scmp.eq.s32.totalorder %s11, 0
    %p129 = por %p127, %p128
    %p130 = scmp.ne.s32.totalorder %s122, %s124
    %p131 = scmp.eq.s32.totalorder %s16, 1
    %p132 = por %p130, %p131
    %p133 = scmp.ne.s32.totalorder %s124, %s125
    %p134 = scmp.eq.s32.totalorder %s16, 0
    %p135 = por %p133, %p134
    %p136 = scmp.ne.s32.totalorder %s124, %s125
    %p137 = scmp.eq.s32.totalorder %s17, 1
    %p138 = por %p136, %p137
    %p140 = scmp.ne.s32.totalorder %s125, %s139
    %p141 = scmp.eq.s32.totalorder %s17, 0
    %p142 = por %p140, %p141
    %s143 = ssub.s32 %s18, %s30
    %s144 = ssub.s32 %s19, %s26
    %s145 = sor.u32 %s143, %s144
    %p146 = scmp.eq.s32.totalorder %s145, 0
    %s148 = sadd.s32 %s147, 1
    %s149 = scalar_select %p146, %s147, %s148
    %p152 = pneg %p146
    %p153 = scmp.eq.s32.totalorder %s11, 1
    %p154 = por %p152, %p153
    %p155 = scmp.ne.s32.totalorder %s147, %s150
    %p156 = scmp.eq.s32.totalorder %s11, 0
    %p157 = por %p155, %p156
    %p158 = scmp.ne.s32.totalorder %s147, %s150
    %p159 = scmp.eq.s32.totalorder %s16, 1
    %p160 = por %p158, %p159
    %p161 = scmp.ne.s32.totalorder %s150, %s151
    %p162 = scmp.eq.s32.totalorder %s16, 0
    %p163 = por %p161, %p162
    %p164 = scmp.ne.s32.totalorder %s150, %s151
    %p165 = scmp.eq.s32.totalorder %s17, 1
    %p166 = por %p164, %p165
    %p168 = scmp.ne.s32.totalorder %s151, %s167
    %p169 = scmp.eq.s32.totalorder %s17, 0
    %p170 = por %p168, %p169
    %p171 = scmp.le.s32.totalorder 1, %s11
    %p172 = scmp.lt.s32.totalorder %s11, 3
    %p173 = pnand %p171, %p172
    %p174 = pneg %p173
    // Predicated region
    $region9: #{position_embedding_learned.1} parent=5 // pred_check
      _
    $region10: #{position_embedding_learned.1} parent=5 // pred_check_branch
      %176 = sbr.rel (%p173) target = $region12
    $region11: #{position_embedding_learned.1} parent=5 // pred_region
      %s177 = ssub.s32 %s11, 1
      // Predicated region
      $region13: #{position_embedding_learned.1} parent=11 // pred_check
        %p178 = pneg %p72
      $region14: #{position_embedding_learned.1} parent=11 // pred_check_branch
        %180 = sbr.rel (%p178) target = $region16
      $region15: #{position_embedding_learned.1} parent=11 // pred_region
        _
      $region16: #{position_embedding_learned.1} parent=11 // pred_fallthru
        _
      // Predicated region
      $region17: #{position_embedding_learned.1} parent=11 // pred_check
        %p181 = pneg %p93
      $region18: #{position_embedding_learned.1} parent=11 // pred_check_branch
        %183 = sbr.rel (%p181) target = $region20
      $region19: #{position_embedding_learned.1} parent=11 // pred_region
        _
      $region20: #{position_embedding_learned.1} parent=11 // pred_fallthru
        _
      // Predicated region
      $region21: #{position_embedding_learned.1} parent=11 // pred_check
        %p184 = pneg %p114
      $region22: #{position_embedding_learned.1} parent=11 // pred_check_branch
        %186 = sbr.rel (%p184) target = $region24
      $region23: #{position_embedding_learned.1} parent=11 // pred_region
        _
      $region24: #{position_embedding_learned.1} parent=11 // pred_fallthru
        _
      // Predicated region
      $region25: #{position_embedding_learned.1} parent=11 // pred_check
        %p187 = pneg %p135
      $region26: #{position_embedding_learned.1} parent=11 // pred_check_branch
        %189 = sbr.rel (%p187) target = $region28
      $region27: #{position_embedding_learned.1} parent=11 // pred_region
        _
      $region28: #{position_embedding_learned.1} parent=11 // pred_fallthru
        _
    $region12: #{position_embedding_learned.1} parent=5 // pred_fallthru
      _
    %p190 = scmp.lt.s32.totalorder %s11, 2
    // Predicated region
    $region29: #{position_embedding_learned.1} parent=5 // pred_check
      %p191 = pneg %p190
    $region30: #{position_embedding_learned.1} parent=5 // pred_check_branch
      %193 = sbr.rel (%p191) target = $region32
    $region31: #{position_embedding_learned.1} parent=5 // pred_region
      // Predicated region
      $region33: #{position_embedding_learned.1} parent=31 // pred_check
        %p194 = pneg %p45
      $region34: #{position_embedding_learned.1} parent=31 // pred_check_branch
        %196 = sbr.rel (%p194) target = $region36
      $region35: #{position_embedding_learned.1} parent=31 // pred_region
        %p197 = scmp.lt.s32.totalorder %s18, 1
        %s198 = scalar_select %p197, %s18, 1
        %p199 = scmp.lt.s32.totalorder %s19, 0
        %s200 = scalar_select %p199, %s19, 0
        %s201 = sadd.s32 %s200, %s198
        %s202 = smul.addr %s201, 4
        %s203 = scalar_lea.vmem %s0, %s202
      $region36: #{position_embedding_learned.1} parent=31 // pred_fallthru
        _
    $region32: #{position_embedding_learned.1} parent=5 // pred_fallthru
      _
    %p204 = scmp.le.s32.totalorder 1, %s11
    %p205 = scmp.lt.s32.totalorder %s11, 3
    %p206 = pnand %p204, %p205
    %p207 = pneg %p206
    // Predicated region
    $region37: #{position_embedding_learned.1} parent=5 // pred_check
      _
    $region38: #{position_embedding_learned.1} parent=5 // pred_check_branch
      %209 = sbr.rel (%p206) target = $region40
    $region39: #{position_embedding_learned.1} parent=5 // pred_region
      %s210 = ssub.s32 %s11, 1
      %p211 = scmp.lt.s32.totalorder %s20, 1
      %s212 = scalar_select %p211, %s20, 1
      %p213 = scmp.lt.s32.totalorder %s21, 0
      %s214 = scalar_select %p213, %s21, 0
      %s215 = sadd.s32 %s214, %s212
      %s216 = smul.addr %s215, 4
      %s217 = scalar_lea.vmem %s0, %s216
      %p218 = pneg %p51
      %p219 = pneg %p48
      %p220 = pneg %p72
      %p221 = pneg %p69
      %p222 = pneg %p93
      %p223 = pneg %p90
      %p224 = pneg %p114
      %p225 = pneg %p111
      %p226 = pneg %p135
      %p227 = pneg %p132
      %p228 = pneg %p163
      %p229 = pneg %p160
      %p230 = scmp.lt.s32.totalorder %s20, 1
      %s231 = scalar_select %p230, %s20, 1
      %p232 = scmp.lt.s32.totalorder %s21, 0
      %s233 = scalar_select %p232, %s21, 0
      %s234 = smul.addr %s231, 32
      %s235 = sadd.s32 %s233, %s234
      %s236 = smul.addr %s235, 4
      %s237 = scalar_lea.vmem %s5, %s236
      %p238 = scmp.lt.s32.totalorder %s20, 1
      %s239 = scalar_select %p238, %s20, 1
      %p240 = scmp.lt.s32.totalorder %s21, 0
      %s241 = scalar_select %p240, %s21, 0
      %s242 = sadd.s32 %s241, %s239
      %s243 = smul.addr %s242, 4
      %s244 = scalar_lea.vmem %s0, %s243
      %p245 = scmp.lt.s32.totalorder %s20, 1
      %s246 = scalar_select %p245, %s20, 1
      %p247 = scmp.lt.s32.totalorder %s21, 0
      %s248 = scalar_select %p247, %s21, 0
      %s249 = smul.addr %s246, 32
      %s250 = sadd.s32 %s248, %s249
      %s251 = smul.addr %s250, 4
      %s252 = scalar_lea.vmem %s5, %s251
      %v254 = vld [vmem:[%s244] sm:$0x7]
      %v255 = vld [vmem:[%s1] sm:$0xff]
      %v256 = vld [vmem:[%s1 + $0x8] sm:$0xff]
      %v257 = vld [vmem:[%s1 + $0x10] sm:$0xff]
      %v258 = vld [vmem:[%s1 + $0x18] sm:$0xff]
      %v259 = vld [vmem:[%s1 + $0x20] sm:$0xff]
      %v260 = vld [vmem:[%s1 + $0x28] sm:$0xff]
      %v261 = vld [vmem:[%s1 + $0x30] sm:$0xff]
      %v262 = vld [vmem:[%s1 + $0x38] sm:$0xff]
      %v263 = vld [vmem:[%s1 + $0x40] sm:$0xff]
      %v264 = vld [vmem:[%s1 + $0x48] sm:$0xff]
      %v265 = vld [vmem:[%s1 + $0x50] sm:$0xff]
      %v266 = vld [vmem:[%s1 + $0x58] sm:$0xff]
      %v267 = vld [vmem:[%s1 + $0x60] sm:$0xff]
      %v268 = vld [vmem:[%s1 + $0x68] sm:$0xff]
      %v269 = vld [vmem:[%s1 + $0x70] sm:$0xff]
      %v270 = vld [vmem:[%s1 + $0x78] sm:$0xff]
      %v271 = vld [vmem:[%s1 + $0x80] sm:$0xff]
      %v272 = vld [vmem:[%s1 + $0x88] sm:$0xff]
      %v273 = vld [vmem:[%s1 + $0x90] sm:$0xff]
      %v274 = vld [vmem:[%s1 + $0x98] sm:$0xff]
      %v275 = vld [vmem:[%s1 + $0xa0] sm:$0xff]
      %v276 = vld [vmem:[%s1 + $0xa8] sm:$0xff]
      %v277 = vld [vmem:[%s1 + $0xb0] sm:$0xff]
      %v278 = vld [vmem:[%s1 + $0xb8] sm:$0xff]
      %v279 = vld [vmem:[%s1 + $0xc0] sm:$0xff]
      %v280 = vld [vmem:[%s1 + $0xc8] sm:$0xff]
      %v281 = vld [vmem:[%s1 + $0xd0] sm:$0xff]
      %v282 = vld [vmem:[%s1 + $0xd8] sm:$0xff]
      %v283 = vld [vmem:[%s1 + $0xe0] sm:$0xff]
      %v284 = vld [vmem:[%s1 + $0xe8] sm:$0xff]
      %v285 = vld [vmem:[%s1 + $0xf0] sm:$0xff]
      %v286 = vld [vmem:[%s1 + $0xf8] sm:$0xff]
      %288 = vset.pattern.permute.xlu0 0
      %289 = vperm.xlu0 %288, %v255
      %v290 = vpop.permute.xlu0 %289
      %293 = vset.pattern.permute.xlu0 0
      %294 = vperm.xlu0 %293, %v256
      %v295 = vpop.permute.xlu0 %294
      %298 = vset.pattern.permute.xlu0 0
      %299 = vperm.xlu0 %298, %v257
      %v300 = vpop.permute.xlu0 %299
      %303 = vset.pattern.permute.xlu0 0
      %304 = vperm.xlu0 %303, %v258
      %v305 = vpop.permute.xlu0 %304
      %308 = vset.pattern.permute.xlu0 0
      %309 = vperm.xlu0 %308, %v259
      %v310 = vpop.permute.xlu0 %309
      %313 = vset.pattern.permute.xlu0 0
      %314 = vperm.xlu0 %313, %v260
      %v315 = vpop.permute.xlu0 %314
      %318 = vset.pattern.permute.xlu0 0
      %319 = vperm.xlu0 %318, %v261
      %v320 = vpop.permute.xlu0 %319
      %323 = vset.pattern.permute.xlu0 0
      %324 = vperm.xlu0 %323, %v262
      %v325 = vpop.permute.xlu0 %324
      %328 = vset.pattern.permute.xlu0 0
      %329 = vperm.xlu0 %328, %v263
      %v330 = vpop.permute.xlu0 %329
      %333 = vset.pattern.permute.xlu0 0
      %334 = vperm.xlu0 %333, %v264
      %v335 = vpop.permute.xlu0 %334
      %338 = vset.pattern.permute.xlu0 0
      %339 = vperm.xlu0 %338, %v265
      %v340 = vpop.permute.xlu0 %339
      %343 = vset.pattern.permute.xlu0 0
      %344 = vperm.xlu0 %343, %v266
      %v345 = vpop.permute.xlu0 %344
      %348 = vset.pattern.permute.xlu0 0
      %349 = vperm.xlu0 %348, %v267
      %v350 = vpop.permute.xlu0 %349
      %353 = vset.pattern.permute.xlu0 0
      %354 = vperm.xlu0 %353, %v268
      %v355 = vpop.permute.xlu0 %354
      %358 = vset.pattern.permute.xlu0 0
      %359 = vperm.xlu0 %358, %v269
      %v360 = vpop.permute.xlu0 %359
      %363 = vset.pattern.permute.xlu0 0
      %364 = vperm.xlu0 %363, %v270
      %v365 = vpop.permute.xlu0 %364
      %368 = vset.pattern.permute.xlu0 0
      %369 = vperm.xlu0 %368, %v271
      %v370 = vpop.permute.xlu0 %369
      %373 = vset.pattern.permute.xlu0 0
      %374 = vperm.xlu0 %373, %v272
      %v375 = vpop.permute.xlu0 %374
      %378 = vset.pattern.permute.xlu0 0
      %379 = vperm.xlu0 %378, %v273
      %v380 = vpop.permute.xlu0 %379
      %383 = vset.pattern.permute.xlu0 0
      %384 = vperm.xlu0 %383, %v274
      %v385 = vpop.permute.xlu0 %384
      %388 = vset.pattern.permute.xlu0 0
      %389 = vperm.xlu0 %388, %v275
      %v390 = vpop.permute.xlu0 %389
      %393 = vset.pattern.permute.xlu0 0
      %394 = vperm.xlu0 %393, %v276
      %v395 = vpop.permute.xlu0 %394
      %398 = vset.pattern.permute.xlu0 0
      %399 = vperm.xlu0 %398, %v277
      %v400 = vpop.permute.xlu0 %399
      %403 = vset.pattern.permute.xlu0 0
      %404 = vperm.xlu0 %403, %v278
      %v405 = vpop.permute.xlu0 %404
      %408 = vset.pattern.permute.xlu0 0
      %409 = vperm.xlu0 %408, %v279
      %v410 = vpop.permute.xlu0 %409
      %413 = vset.pattern.permute.xlu0 0
      %414 = vperm.xlu0 %413, %v280
      %v415 = vpop.permute.xlu0 %414
      %418 = vset.pattern.permute.xlu0 0
      %419 = vperm.xlu0 %418, %v281
      %v420 = vpop.permute.xlu0 %419
      %423 = vset.pattern.permute.xlu0 0
      %424 = vperm.xlu0 %423, %v282
      %v425 = vpop.permute.xlu0 %424
      %428 = vset.pattern.permute.xlu0 0
      %429 = vperm.xlu0 %428, %v283
      %v430 = vpop.permute.xlu0 %429
      %433 = vset.pattern.permute.xlu0 0
      %434 = vperm.xlu0 %433, %v284
      %v435 = vpop.permute.xlu0 %434
      %438 = vset.pattern.permute.xlu0 0
      %439 = vperm.xlu0 %438, %v285
      %v440 = vpop.permute.xlu0 %439
      %443 = vset.pattern.permute.xlu0 0
      %444 = vperm.xlu0 %443, %v286
      %v445 = vpop.permute.xlu0 %444
      %v447 = vlaneseq
      %v448 = vshrl.u32 %v447, 7
      %v449 = vsub.s32 0, %v448
      %v450 = vrot.slane %v254, %v449
      %v451 = vmul.f32 %v290, %v450
      %v452 = vmul.f32 %v295, %v450
      %v453 = vmul.f32 %v300, %v450
      %v454 = vmul.f32 %v305, %v450
      %v455 = vmul.f32 %v310, %v450
      %v456 = vmul.f32 %v315, %v450
      %v457 = vmul.f32 %v320, %v450
      %v458 = vmul.f32 %v325, %v450
      %v459 = vmul.f32 %v330, %v450
      %v460 = vmul.f32 %v335, %v450
      %v461 = vmul.f32 %v340, %v450
      %v462 = vmul.f32 %v345, %v450
      %v463 = vmul.f32 %v350, %v450
      %v464 = vmul.f32 %v355, %v450
      %v465 = vmul.f32 %v360, %v450
      %v466 = vmul.f32 %v365, %v450
      %v467 = vmul.f32 %v370, %v450
      %v468 = vmul.f32 %v375, %v450
      %v469 = vmul.f32 %v380, %v450
      %v470 = vmul.f32 %v385, %v450
      %v471 = vmul.f32 %v390, %v450
      %v472 = vmul.f32 %v395, %v450
      %v473 = vmul.f32 %v400, %v450
      %v474 = vmul.f32 %v405, %v450
      %v475 = vmul.f32 %v410, %v450
      %v476 = vmul.f32 %v415, %v450
      %v477 = vmul.f32 %v420, %v450
      %v478 = vmul.f32 %v425, %v450
      %v479 = vmul.f32 %v430, %v450
      %v480 = vmul.f32 %v435, %v450
      %v481 = vmul.f32 %v440, %v450
      %v482 = vmul.f32 %v445, %v450
      %483 = vset.pattern.permute.xlu0 1
      %484 = vperm.xlu0 %483, %v255
      %v485 = vpop.permute.xlu0 %484
      %487 = vset.pattern.permute.xlu0 1
      %488 = vperm.xlu0 %487, %v256
      %v489 = vpop.permute.xlu0 %488
      %491 = vset.pattern.permute.xlu0 1
      %492 = vperm.xlu0 %491, %v257
      %v493 = vpop.permute.xlu0 %492
      %495 = vset.pattern.permute.xlu0 1
      %496 = vperm.xlu0 %495, %v258
      %v497 = vpop.permute.xlu0 %496
      %499 = vset.pattern.permute.xlu0 1
      %500 = vperm.xlu0 %499, %v259
      %v501 = vpop.permute.xlu0 %500
      %503 = vset.pattern.permute.xlu0 1
      %504 = vperm.xlu0 %503, %v260
      %v505 = vpop.permute.xlu0 %504
      %507 = vset.pattern.permute.xlu0 1
      %508 = vperm.xlu0 %507, %v261
      %v509 = vpop.permute.xlu0 %508
      %511 = vset.pattern.permute.xlu0 1
      %512 = vperm.xlu0 %511, %v262
      %v513 = vpop.permute.xlu0 %512
      %515 = vset.pattern.permute.xlu0 1
      %516 = vperm.xlu0 %515, %v263
      %v517 = vpop.permute.xlu0 %516
      %519 = vset.pattern.permute.xlu0 1
      %520 = vperm.xlu0 %519, %v264
      %v521 = vpop.permute.xlu0 %520
      %523 = vset.pattern.permute.xlu0 1
      %524 = vperm.xlu0 %523, %v265
      %v525 = vpop.permute.xlu0 %524
      %527 = vset.pattern.permute.xlu0 1
      %528 = vperm.xlu0 %527, %v266
      %v529 = vpop.permute.xlu0 %528
      %531 = vset.pattern.permute.xlu0 1
      %532 = vperm.xlu0 %531, %v267
      %v533 = vpop.permute.xlu0 %532
      %535 = vset.pattern.permute.xlu0 1
      %536 = vperm.xlu0 %535, %v268
      %v537 = vpop.permute.xlu0 %536
      %539 = vset.pattern.permute.xlu0 1
      %540 = vperm.xlu0 %539, %v269
      %v541 = vpop.permute.xlu0 %540
      %543 = vset.pattern.permute.xlu0 1
      %544 = vperm.xlu0 %543, %v270
      %v545 = vpop.permute.xlu0 %544
      %547 = vset.pattern.permute.xlu0 1
      %548 = vperm.xlu0 %547, %v271
      %v549 = vpop.permute.xlu0 %548
      %551 = vset.pattern.permute.xlu0 1
      %552 = vperm.xlu0 %551, %v272
      %v553 = vpop.permute.xlu0 %552
      %555 = vset.pattern.permute.xlu0 1
      %556 = vperm.xlu0 %555, %v273
      %v557 = vpop.permute.xlu0 %556
      %559 = vset.pattern.permute.xlu0 1
      %560 = vperm.xlu0 %559, %v274
      %v561 = vpop.permute.xlu0 %560
      %563 = vset.pattern.permute.xlu0 1
      %564 = vperm.xlu0 %563, %v275
      %v565 = vpop.permute.xlu0 %564
      %567 = vset.pattern.permute.xlu0 1
      %568 = vperm.xlu0 %567, %v276
      %v569 = vpop.permute.xlu0 %568
      %571 = vset.pattern.permute.xlu0 1
      %572 = vperm.xlu0 %571, %v277
      %v573 = vpop.permute.xlu0 %572
      %575 = vset.pattern.permute.xlu0 1
      %576 = vperm.xlu0 %575, %v278
      %v577 = vpop.permute.xlu0 %576
      %579 = vset.pattern.permute.xlu0 1
      %580 = vperm.xlu0 %579, %v279
      %v581 = vpop.permute.xlu0 %580
      %583 = vset.pattern.permute.xlu0 1
      %584 = vperm.xlu0 %583, %v280
      %v585 = vpop.permute.xlu0 %584
      %587 = vset.pattern.permute.xlu0 1
      %588 = vperm.xlu0 %587, %v281
      %v589 = vpop.permute.xlu0 %588
      %591 = vset.pattern.permute.xlu0 1
      %592 = vperm.xlu0 %591, %v282
      %v593 = vpop.permute.xlu0 %592
      %595 = vset.pattern.permute.xlu0 1
      %596 = vperm.xlu0 %595, %v283
      %v597 = vpop.permute.xlu0 %596
      %599 = vset.pattern.permute.xlu0 1
      %600 = vperm.xlu0 %599, %v284
      %v601 = vpop.permute.xlu0 %600
      %603 = vset.pattern.permute.xlu0 1
      %604 = vperm.xlu0 %603, %v285
      %v605 = vpop.permute.xlu0 %604
      %607 = vset.pattern.permute.xlu0 1
      %608 = vperm.xlu0 %607, %v286
      %v609 = vpop.permute.xlu0 %608
      %v611 = vlaneseq
      %v612 = vshrl.u32 %v611, 7
      %v613 = vsub.s32 1, %v612
      %v614 = vrot.slane %v254, %v613
      %v615 = vmul.f32 %v485, %v614
      %v616 = vmul.f32 %v489, %v614
      %v617 = vmul.f32 %v493, %v614
      %v618 = vmul.f32 %v497, %v614
      %v619 = vmul.f32 %v501, %v614
      %v620 = vmul.f32 %v505, %v614
      %v621 = vmul.f32 %v509, %v614
      %v622 = vmul.f32 %v513, %v614
      %v623 = vmul.f32 %v517, %v614
      %v624 = vmul.f32 %v521, %v614
      %v625 = vmul.f32 %v525, %v614
      %v626 = vmul.f32 %v529, %v614
      %v627 = vmul.f32 %v533, %v614
      %v628 = vmul.f32 %v537, %v614
      %v629 = vmul.f32 %v541, %v614
      %v630 = vmul.f32 %v545, %v614
      %v631 = vmul.f32 %v549, %v614
      %v632 = vmul.f32 %v553, %v614
      %v633 = vmul.f32 %v557, %v614
      %v634 = vmul.f32 %v561, %v614
      %v635 = vmul.f32 %v565, %v614
      %v636 = vmul.f32 %v569, %v614
      %v637 = vmul.f32 %v573, %v614
      %v638 = vmul.f32 %v577, %v614
      %v639 = vmul.f32 %v581, %v614
      %v640 = vmul.f32 %v585, %v614
      %v641 = vmul.f32 %v589, %v614
      %v642 = vmul.f32 %v593, %v614
      %v643 = vmul.f32 %v597, %v614
      %v644 = vmul.f32 %v601, %v614
      %v645 = vmul.f32 %v605, %v614
      %v646 = vmul.f32 %v609, %v614
      %v647 = vadd.f32 %v451, %v615
      %v648 = vadd.f32 %v452, %v616
      %v649 = vadd.f32 %v453, %v617
      %v650 = vadd.f32 %v454, %v618
      %v651 = vadd.f32 %v455, %v619
      %v652 = vadd.f32 %v456, %v620
      %v653 = vadd.f32 %v457, %v621
      %v654 = vadd.f32 %v458, %v622
      %v655 = vadd.f32 %v459, %v623
      %v656 = vadd.f32 %v460, %v624
      %v657 = vadd.f32 %v461, %v625
      %v658 = vadd.f32 %v462, %v626
      %v659 = vadd.f32 %v463, %v627
      %v660 = vadd.f32 %v464, %v628
      %v661 = vadd.f32 %v465, %v629
      %v662 = vadd.f32 %v466, %v630
      %v663 = vadd.f32 %v467, %v631
      %v664 = vadd.f32 %v468, %v632
      %v665 = vadd.f32 %v469, %v633
      %v666 = vadd.f32 %v470, %v634
      %v667 = vadd.f32 %v471, %v635
      %v668 = vadd.f32 %v472, %v636
      %v669 = vadd.f32 %v473, %v637
      %v670 = vadd.f32 %v474, %v638
      %v671 = vadd.f32 %v475, %v639
      %v672 = vadd.f32 %v476, %v640
      %v673 = vadd.f32 %v477, %v641
      %v674 = vadd.f32 %v478, %v642
      %v675 = vadd.f32 %v479, %v643
      %v676 = vadd.f32 %v480, %v644
      %v677 = vadd.f32 %v481, %v645
      %v678 = vadd.f32 %v482, %v646
      %679 = vset.pattern.permute.xlu0 2
      %680 = vperm.xlu0 %679, %v255
      %v681 = vpop.permute.xlu0 %680
      %683 = vset.pattern.permute.xlu0 2
      %684 = vperm.xlu0 %683, %v256
      %v685 = vpop.permute.xlu0 %684
      %687 = vset.pattern.permute.xlu0 2
      %688 = vperm.xlu0 %687, %v257
      %v689 = vpop.permute.xlu0 %688
      %691 = vset.pattern.permute.xlu0 2
      %692 = vperm.xlu0 %691, %v258
      %v693 = vpop.permute.xlu0 %692
      %695 = vset.pattern.permute.xlu0 2
      %696 = vperm.xlu0 %695, %v259
      %v697 = vpop.permute.xlu0 %696
      %699 = vset.pattern.permute.xlu0 2
      %700 = vperm.xlu0 %699, %v260
      %v701 = vpop.permute.xlu0 %700
      %703 = vset.pattern.permute.xlu0 2
      %704 = vperm.xlu0 %703, %v261
      %v705 = vpop.permute.xlu0 %704
      %707 = vset.pattern.permute.xlu0 2
      %708 = vperm.xlu0 %707, %v262
      %v709 = vpop.permute.xlu0 %708
      %711 = vset.pattern.permute.xlu0 2
      %712 = vperm.xlu0 %711, %v263
      %v713 = vpop.permute.xlu0 %712
      %715 = vset.pattern.permute.xlu0 2
      %716 = vperm.xlu0 %715, %v264
      %v717 = vpop.permute.xlu0 %716
      %719 = vset.pattern.permute.xlu0 2
      %720 = vperm.xlu0 %719, %v265
      %v721 = vpop.permute.xlu0 %720
      %723 = vset.pattern.permute.xlu0 2
      %724 = vperm.xlu0 %723, %v266
      %v725 = vpop.permute.xlu0 %724
      %727 = vset.pattern.permute.xlu0 2
      %728 = vperm.xlu0 %727, %v267
      %v729 = vpop.permute.xlu0 %728
      %731 = vset.pattern.permute.xlu0 2
      %732 = vperm.xlu0 %731, %v268
      %v733 = vpop.permute.xlu0 %732
      %735 = vset.pattern.permute.xlu0 2
      %736 = vperm.xlu0 %735, %v269
      %v737 = vpop.permute.xlu0 %736
      %739 = vset.pattern.permute.xlu0 2
      %740 = vperm.xlu0 %739, %v270
      %v741 = vpop.permute.xlu0 %740
      %743 = vset.pattern.permute.xlu0 2
      %744 = vperm.xlu0 %743, %v271
      %v745 = vpop.permute.xlu0 %744
      %747 = vset.pattern.permute.xlu0 2
      %748 = vperm.xlu0 %747, %v272
      %v749 = vpop.permute.xlu0 %748
      %751 = vset.pattern.permute.xlu0 2
      %752 = vperm.xlu0 %751, %v273
      %v753 = vpop.permute.xlu0 %752
      %755 = vset.pattern.permute.xlu0 2
      %756 = vperm.xlu0 %755, %v274
      %v757 = vpop.permute.xlu0 %756
      %759 = vset.pattern.permute.xlu0 2
      %760 = vperm.xlu0 %759, %v275
      %v761 = vpop.permute.xlu0 %760
      %763 = vset.pattern.permute.xlu0 2
      %764 = vperm.xlu0 %763, %v276
      %v765 = vpop.permute.xlu0 %764
      %767 = vset.pattern.permute.xlu0 2
      %768 = vperm.xlu0 %767, %v277
      %v769 = vpop.permute.xlu0 %768
      %771 = vset.pattern.permute.xlu0 2
      %772 = vperm.xlu0 %771, %v278
      %v773 = vpop.permute.xlu0 %772
      %775 = vset.pattern.permute.xlu0 2
      %776 = vperm.xlu0 %775, %v279
      %v777 = vpop.permute.xlu0 %776
      %779 = vset.pattern.permute.xlu0 2
      %780 = vperm.xlu0 %779, %v280
      %v781 = vpop.permute.xlu0 %780
      %783 = vset.pattern.permute.xlu0 2
      %784 = vperm.xlu0 %783, %v281
      %v785 = vpop.permute.xlu0 %784
      %787 = vset.pattern.permute.xlu0 2
      %788 = vperm.xlu0 %787, %v282
      %v789 = vpop.permute.xlu0 %788
      %791 = vset.pattern.permute.xlu0 2
      %792 = vperm.xlu0 %791, %v283
      %v793 = vpop.permute.xlu0 %792
      %795 = vset.pattern.permute.xlu0 2
      %796 = vperm.xlu0 %795, %v284
      %v797 = vpop.permute.xlu0 %796
      %799 = vset.pattern.permute.xlu0 2
      %800 = vperm.xlu0 %799, %v285
      %v801 = vpop.permute.xlu0 %800
      %803 = vset.pattern.permute.xlu0 2
      %804 = vperm.xlu0 %803, %v286
      %v805 = vpop.permute.xlu0 %804
      %v807 = vlaneseq
      %v808 = vshrl.u32 %v807, 7
      %v809 = vsub.s32 2, %v808
      %v810 = vrot.slane %v254, %v809
      %v811 = vmul.f32 %v681, %v810
      %v812 = vmul.f32 %v685, %v810
      %v813 = vmul.f32 %v689, %v810
      %v814 = vmul.f32 %v693, %v810
      %v815 = vmul.f32 %v697, %v810
      %v816 = vmul.f32 %v701, %v810
      %v817 = vmul.f32 %v705, %v810
      %v818 = vmul.f32 %v709, %v810
      %v819 = vmul.f32 %v713, %v810
      %v820 = vmul.f32 %v717, %v810
      %v821 = vmul.f32 %v721, %v810
      %v822 = vmul.f32 %v725, %v810
      %v823 = vmul.f32 %v729, %v810
      %v824 = vmul.f32 %v733, %v810
      %v825 = vmul.f32 %v737, %v810
      %v826 = vmul.f32 %v741, %v810
      %v827 = vmul.f32 %v745, %v810
      %v828 = vmul.f32 %v749, %v810
      %v829 = vmul.f32 %v753, %v810
      %v830 = vmul.f32 %v757, %v810
      %v831 = vmul.f32 %v761, %v810
      %v832 = vmul.f32 %v765, %v810
      %v833 = vmul.f32 %v769, %v810
      %v834 = vmul.f32 %v773, %v810
      %v835 = vmul.f32 %v777, %v810
      %v836 = vmul.f32 %v781, %v810
      %v837 = vmul.f32 %v785, %v810
      %v838 = vmul.f32 %v789, %v810
      %v839 = vmul.f32 %v793, %v810
      %v840 = vmul.f32 %v797, %v810
      %v841 = vmul.f32 %v801, %v810
      %v842 = vmul.f32 %v805, %v810
      %v843 = vadd.f32 %v647, %v811
      %v844 = vadd.f32 %v648, %v812
      %v845 = vadd.f32 %v649, %v813
      %v846 = vadd.f32 %v650, %v814
      %v847 = vadd.f32 %v651, %v815
      %v848 = vadd.f32 %v652, %v816
      %v849 = vadd.f32 %v653, %v817
      %v850 = vadd.f32 %v654, %v818
      %v851 = vadd.f32 %v655, %v819
      %v852 = vadd.f32 %v656, %v820
      %v853 = vadd.f32 %v657, %v821
      %v854 = vadd.f32 %v658, %v822
      %v855 = vadd.f32 %v659, %v823
      %v856 = vadd.f32 %v660, %v824
      %v857 = vadd.f32 %v661, %v825
      %v858 = vadd.f32 %v662, %v826
      %v859 = vadd.f32 %v663, %v827
      %v860 = vadd.f32 %v664, %v828
      %v861 = vadd.f32 %v665, %v829
      %v862 = vadd.f32 %v666, %v830
      %v863 = vadd.f32 %v667, %v831
      %v864 = vadd.f32 %v668, %v832
      %v865 = vadd.f32 %v669, %v833
      %v866 = vadd.f32 %v670, %v834
      %v867 = vadd.f32 %v671, %v835
      %v868 = vadd.f32 %v672, %v836
      %v869 = vadd.f32 %v673, %v837
      %v870 = vadd.f32 %v674, %v838
      %v871 = vadd.f32 %v675, %v839
      %v872 = vadd.f32 %v676, %v840
      %v873 = vadd.f32 %v677, %v841
      %v874 = vadd.f32 %v678, %v842
      %v875 = vld [vmem:[%s2] sm:$0xff]
      %v876 = vld [vmem:[%s2 + $0x8] sm:$0xff]
      %v877 = vld [vmem:[%s2 + $0x10] sm:$0xff]
      %v878 = vld [vmem:[%s2 + $0x18] sm:$0xff]
      %v879 = vld [vmem:[%s2 + $0x20] sm:$0xff]
      %v880 = vld [vmem:[%s2 + $0x28] sm:$0xff]
      %v881 = vld [vmem:[%s2 + $0x30] sm:$0xff]
      %v882 = vld [vmem:[%s2 + $0x38] sm:$0xff]
      %v883 = vld [vmem:[%s2 + $0x40] sm:$0xff]
      %v884 = vld [vmem:[%s2 + $0x48] sm:$0xff]
      %v885 = vld [vmem:[%s2 + $0x50] sm:$0xff]
      %v886 = vld [vmem:[%s2 + $0x58] sm:$0xff]
      %v887 = vld [vmem:[%s2 + $0x60] sm:$0xff]
      %v888 = vld [vmem:[%s2 + $0x68] sm:$0xff]
      %v889 = vld [vmem:[%s2 + $0x70] sm:$0xff]
      %v890 = vld [vmem:[%s2 + $0x78] sm:$0xff]
      %v891 = vld [vmem:[%s2 + $0x80] sm:$0xff]
      %v892 = vld [vmem:[%s2 + $0x88] sm:$0xff]
      %v893 = vld [vmem:[%s2 + $0x90] sm:$0xff]
      %v894 = vld [vmem:[%s2 + $0x98] sm:$0xff]
      %v895 = vld [vmem:[%s2 + $0xa0] sm:$0xff]
      %v896 = vld [vmem:[%s2 + $0xa8] sm:$0xff]
      %v897 = vld [vmem:[%s2 + $0xb0] sm:$0xff]
      %v898 = vld [vmem:[%s2 + $0xb8] sm:$0xff]
      %v899 = vld [vmem:[%s2 + $0xc0] sm:$0xff]
      %v900 = vld [vmem:[%s2 + $0xc8] sm:$0xff]
      %v901 = vld [vmem:[%s2 + $0xd0] sm:$0xff]
      %v902 = vld [vmem:[%s2 + $0xd8] sm:$0xff]
      %v903 = vld [vmem:[%s2 + $0xe0] sm:$0xff]
      %v904 = vld [vmem:[%s2 + $0xe8] sm:$0xff]
      %v905 = vld [vmem:[%s2 + $0xf0] sm:$0xff]
      %v906 = vld [vmem:[%s2 + $0xf8] sm:$0xff]
      %908 = vset.pattern.permute.xlu0 0
      %909 = vperm.xlu0 %908, %v875
      %v910 = vpop.permute.xlu0 %909
      %913 = vset.pattern.permute.xlu0 0
      %914 = vperm.xlu0 %913, %v876
      %v915 = vpop.permute.xlu0 %914
      %918 = vset.pattern.permute.xlu0 0
      %919 = vperm.xlu0 %918, %v877
      %v920 = vpop.permute.xlu0 %919
      %923 = vset.pattern.permute.xlu0 0
      %924 = vperm.xlu0 %923, %v878
      %v925 = vpop.permute.xlu0 %924
      %928 = vset.pattern.permute.xlu0 0
      %929 = vperm.xlu0 %928, %v879
      %v930 = vpop.permute.xlu0 %929
      %933 = vset.pattern.permute.xlu0 0
      %934 = vperm.xlu0 %933, %v880
      %v935 = vpop.permute.xlu0 %934
      %938 = vset.pattern.permute.xlu0 0
      %939 = vperm.xlu0 %938, %v881
      %v940 = vpop.permute.xlu0 %939
      %943 = vset.pattern.permute.xlu0 0
      %944 = vperm.xlu0 %943, %v882
      %v945 = vpop.permute.xlu0 %944
      %948 = vset.pattern.permute.xlu0 0
      %949 = vperm.xlu0 %948, %v883
      %v950 = vpop.permute.xlu0 %949
      %953 = vset.pattern.permute.xlu0 0
      %954 = vperm.xlu0 %953, %v884
      %v955 = vpop.permute.xlu0 %954
      %958 = vset.pattern.permute.xlu0 0
      %959 = vperm.xlu0 %958, %v885
      %v960 = vpop.permute.xlu0 %959
      %963 = vset.pattern.permute.xlu0 0
      %964 = vperm.xlu0 %963, %v886
      %v965 = vpop.permute.xlu0 %964
      %968 = vset.pattern.permute.xlu0 0
      %969 = vperm.xlu0 %968, %v887
      %v970 = vpop.permute.xlu0 %969
      %973 = vset.pattern.permute.xlu0 0
      %974 = vperm.xlu0 %973, %v888
      %v975 = vpop.permute.xlu0 %974
      %978 = vset.pattern.permute.xlu0 0
      %979 = vperm.xlu0 %978, %v889
      %v980 = vpop.permute.xlu0 %979
      %983 = vset.pattern.permute.xlu0 0
      %984 = vperm.xlu0 %983, %v890
      %v985 = vpop.permute.xlu0 %984
      %988 = vset.pattern.permute.xlu0 0
      %989 = vperm.xlu0 %988, %v891
      %v990 = vpop.permute.xlu0 %989
      %993 = vset.pattern.permute.xlu0 0
      %994 = vperm.xlu0 %993, %v892
      %v995 = vpop.permute.xlu0 %994
      %998 = vset.pattern.permute.xlu0 0
      %999 = vperm.xlu0 %998, %v893
      %v1000 = vpop.permute.xlu0 %999
      %1003 = vset.pattern.permute.xlu0 0
      %1004 = vperm.xlu0 %1003, %v894
      %v1005 = vpop.permute.xlu0 %1004
      %1008 = vset.pattern.permute.xlu0 0
      %1009 = vperm.xlu0 %1008, %v895
      %v1010 = vpop.permute.xlu0 %1009
      %1013 = vset.pattern.permute.xlu0 0
      %1014 = vperm.xlu0 %1013, %v896
      %v1015 = vpop.permute.xlu0 %1014
      %1018 = vset.pattern.permute.xlu0 0
      %1019 = vperm.xlu0 %1018, %v897
      %v1020 = vpop.permute.xlu0 %1019
      %1023 = vset.pattern.permute.xlu0 0
      %1024 = vperm.xlu0 %1023, %v898
      %v1025 = vpop.permute.xlu0 %1024
      %1028 = vset.pattern.permute.xlu0 0
      %1029 = vperm.xlu0 %1028, %v899
      %v1030 = vpop.permute.xlu0 %1029
      %1033 = vset.pattern.permute.xlu0 0
      %1034 = vperm.xlu0 %1033, %v900
      %v1035 = vpop.permute.xlu0 %1034
      %1038 = vset.pattern.permute.xlu0 0
      %1039 = vperm.xlu0 %1038, %v901
      %v1040 = vpop.permute.xlu0 %1039
      %1043 = vset.pattern.permute.xlu0 0
      %1044 = vperm.xlu0 %1043, %v902
      %v1045 = vpop.permute.xlu0 %1044
      %1048 = vset.pattern.permute.xlu0 0
      %1049 = vperm.xlu0 %1048, %v903
      %v1050 = vpop.permute.xlu0 %1049
      %1053 = vset.pattern.permute.xlu0 0
      %1054 = vperm.xlu0 %1053, %v904
      %v1055 = vpop.permute.xlu0 %1054
      %1058 = vset.pattern.permute.xlu0 0
      %1059 = vperm.xlu0 %1058, %v905
      %v1060 = vpop.permute.xlu0 %1059
      %1063 = vset.pattern.permute.xlu0 0
      %1064 = vperm.xlu0 %1063, %v906
      %v1065 = vpop.permute.xlu0 %1064
      %v1067 = vadd.f32 %v843, %v910
      %v1068 = vadd.f32 %v844, %v915
      %v1069 = vadd.f32 %v845, %v920
      %v1070 = vadd.f32 %v846, %v925
      %v1071 = vadd.f32 %v847, %v930
      %v1072 = vadd.f32 %v848, %v935
      %v1073 = vadd.f32 %v849, %v940
      %v1074 = vadd.f32 %v850, %v945
      %v1075 = vadd.f32 %v851, %v950
      %v1076 = vadd.f32 %v852, %v955
      %v1077 = vadd.f32 %v853, %v960
      %v1078 = vadd.f32 %v854, %v965
      %v1079 = vadd.f32 %v855, %v970
      %v1080 = vadd.f32 %v856, %v975
      %v1081 = vadd.f32 %v857, %v980
      %v1082 = vadd.f32 %v858, %v985
      %v1083 = vadd.f32 %v859, %v990
      %v1084 = vadd.f32 %v860, %v995
      %v1085 = vadd.f32 %v861, %v1000
      %v1086 = vadd.f32 %v862, %v1005
      %v1087 = vadd.f32 %v863, %v1010
      %v1088 = vadd.f32 %v864, %v1015
      %v1089 = vadd.f32 %v865, %v1020
      %v1090 = vadd.f32 %v866, %v1025
      %v1091 = vadd.f32 %v867, %v1030
      %v1092 = vadd.f32 %v868, %v1035
      %v1093 = vadd.f32 %v869, %v1040
      %v1094 = vadd.f32 %v870, %v1045
      %v1095 = vadd.f32 %v871, %v1050
      %v1096 = vadd.f32 %v872, %v1055
      %v1097 = vadd.f32 %v873, %v1060
      %v1098 = vadd.f32 %v874, %v1065
      %v1099 = vmax.f32 %v1067, 0.0
      %v1100 = vmax.f32 %v1068, 0.0
      %v1101 = vmax.f32 %v1069, 0.0
      %v1102 = vmax.f32 %v1070, 0.0
      %v1103 = vmax.f32 %v1071, 0.0
      %v1104 = vmax.f32 %v1072, 0.0
      %v1105 = vmax.f32 %v1073, 0.0
      %v1106 = vmax.f32 %v1074, 0.0
      %v1107 = vmax.f32 %v1075, 0.0
      %v1108 = vmax.f32 %v1076, 0.0
      %v1109 = vmax.f32 %v1077, 0.0
      %v1110 = vmax.f32 %v1078, 0.0
      %v1111 = vmax.f32 %v1079, 0.0
      %v1112 = vmax.f32 %v1080, 0.0
      %v1113 = vmax.f32 %v1081, 0.0
      %v1114 = vmax.f32 %v1082, 0.0
      %v1115 = vmax.f32 %v1083, 0.0
      %v1116 = vmax.f32 %v1084, 0.0
      %v1117 = vmax.f32 %v1085, 0.0
      %v1118 = vmax.f32 %v1086, 0.0
      %v1119 = vmax.f32 %v1087, 0.0
      %v1120 = vmax.f32 %v1088, 0.0
      %v1121 = vmax.f32 %v1089, 0.0
      %v1122 = vmax.f32 %v1090, 0.0
      %v1123 = vmax.f32 %v1091, 0.0
      %v1124 = vmax.f32 %v1092, 0.0
      %v1125 = vmax.f32 %v1093, 0.0
      %v1126 = vmax.f32 %v1094, 0.0
      %v1127 = vmax.f32 %v1095, 0.0
      %v1128 = vmax.f32 %v1096, 0.0
      %v1129 = vmax.f32 %v1097, 0.0
      %v1130 = vmax.f32 %v1098, 0.0
      %v1131 = vld [vmem:[%s3] sm:$0xff]
      %v1132 = vld [vmem:[%s3 + $0x8] sm:$0xff]
      %v1133 = vld [vmem:[%s3 + $0x10] sm:$0xff]
      %v1134 = vld [vmem:[%s3 + $0x18] sm:$0xff]
      %v1135 = vld [vmem:[%s3 + $0x20] sm:$0xff]
      %v1136 = vld [vmem:[%s3 + $0x28] sm:$0xff]
      %v1137 = vld [vmem:[%s3 + $0x30] sm:$0xff]
      %v1138 = vld [vmem:[%s3 + $0x38] sm:$0xff]
      %v1139 = vld [vmem:[%s3 + $0x40] sm:$0xff]
      %v1140 = vld [vmem:[%s3 + $0x48] sm:$0xff]
      %v1141 = vld [vmem:[%s3 + $0x50] sm:$0xff]
      %v1142 = vld [vmem:[%s3 + $0x58] sm:$0xff]
      %v1143 = vld [vmem:[%s3 + $0x60] sm:$0xff]
      %v1144 = vld [vmem:[%s3 + $0x68] sm:$0xff]
      %v1145 = vld [vmem:[%s3 + $0x70] sm:$0xff]
      %v1146 = vld [vmem:[%s3 + $0x78] sm:$0xff]
      %v1147 = vld [vmem:[%s3 + $0x80] sm:$0xff]
      %v1148 = vld [vmem:[%s3 + $0x88] sm:$0xff]
      %v1149 = vld [vmem:[%s3 + $0x90] sm:$0xff]
      %v1150 = vld [vmem:[%s3 + $0x98] sm:$0xff]
      %v1151 = vld [vmem:[%s3 + $0xa0] sm:$0xff]
      %v1152 = vld [vmem:[%s3 + $0xa8] sm:$0xff]
      %v1153 = vld [vmem:[%s3 + $0xb0] sm:$0xff]
      %v1154 = vld [vmem:[%s3 + $0xb8] sm:$0xff]
      %v1155 = vld [vmem:[%s3 + $0xc0] sm:$0xff]
      %v1156 = vld [vmem:[%s3 + $0xc8] sm:$0xff]
      %v1157 = vld [vmem:[%s3 + $0xd0] sm:$0xff]
      %v1158 = vld [vmem:[%s3 + $0xd8] sm:$0xff]
      %v1159 = vld [vmem:[%s3 + $0xe0] sm:$0xff]
      %v1160 = vld [vmem:[%s3 + $0xe8] sm:$0xff]
      %v1161 = vld [vmem:[%s3 + $0xf0] sm:$0xff]
      %v1162 = vld [vmem:[%s3 + $0xf8] sm:$0xff]
      %v1163 = vpack.c.bf16 %v1100, %v1099
      %v1164 = vpack.c.bf16 %v1102, %v1101
      %v1165 = vpack.c.bf16 %v1104, %v1103
      %v1166 = vpack.c.bf16 %v1106, %v1105
      %v1167 = vpack.c.bf16 %v1108, %v1107
      %v1168 = vpack.c.bf16 %v1110, %v1109
      %v1169 = vpack.c.bf16 %v1112, %v1111
      %v1170 = vpack.c.bf16 %v1114, %v1113
      %v1171 = vpack.c.bf16 %v1116, %v1115
      %v1172 = vpack.c.bf16 %v1118, %v1117
      %v1173 = vpack.c.bf16 %v1120, %v1119
      %v1174 = vpack.c.bf16 %v1122, %v1121
      %v1175 = vpack.c.bf16 %v1124, %v1123
      %v1176 = vpack.c.bf16 %v1126, %v1125
      %v1177 = vpack.c.bf16 %v1128, %v1127
      %v1178 = vpack.c.bf16 %v1130, %v1129
      %v1179 = vld [vmem:[%s4] sm:$0xff]
      %v1180 = vld [vmem:[%s4 + $0x8] sm:$0xff]
      %v1181 = vld [vmem:[%s4 + $0x10] sm:$0xff]
      %v1182 = vld [vmem:[%s4 + $0x18] sm:$0xff]
      %v1183 = vld [vmem:[%s4 + $0x20] sm:$0xff]
      %v1184 = vld [vmem:[%s4 + $0x28] sm:$0xff]
      %v1185 = vld [vmem:[%s4 + $0x30] sm:$0xff]
      %v1186 = vld [vmem:[%s4 + $0x38] sm:$0xff]
      %v1187 = vld [vmem:[%s4 + $0x40] sm:$0xff]
      %v1188 = vld [vmem:[%s4 + $0x48] sm:$0xff]
      %v1189 = vld [vmem:[%s4 + $0x50] sm:$0xff]
      %v1190 = vld [vmem:[%s4 + $0x58] sm:$0xff]
      %v1191 = vld [vmem:[%s4 + $0x60] sm:$0xff]
      %v1192 = vld [vmem:[%s4 + $0x68] sm:$0xff]
      %v1193 = vld [vmem:[%s4 + $0x70] sm:$0xff]
      %v1194 = vld [vmem:[%s4 + $0x78] sm:$0xff]
      %v1195 = vld [vmem:[%s4 + $0x80] sm:$0xff]
      %v1196 = vld [vmem:[%s4 + $0x88] sm:$0xff]
      %v1197 = vld [vmem:[%s4 + $0x90] sm:$0xff]
      %v1198 = vld [vmem:[%s4 + $0x98] sm:$0xff]
      %v1199 = vld [vmem:[%s4 + $0xa0] sm:$0xff]
      %v1200 = vld [vmem:[%s4 + $0xa8] sm:$0xff]
      %v1201 = vld [vmem:[%s4 + $0xb0] sm:$0xff]
      %v1202 = vld [vmem:[%s4 + $0xb8] sm:$0xff]
      %v1203 = vld [vmem:[%s4 + $0xc0] sm:$0xff]
      %v1204 = vld [vmem:[%s4 + $0xc8] sm:$0xff]
      %v1205 = vld [vmem:[%s4 + $0xd0] sm:$0xff]
      %v1206 = vld [vmem:[%s4 + $0xd8] sm:$0xff]
      %v1207 = vld [vmem:[%s4 + $0xe0] sm:$0xff]
      %v1208 = vld [vmem:[%s4 + $0xe8] sm:$0xff]
      %v1209 = vld [vmem:[%s4 + $0xf0] sm:$0xff]
      %v1210 = vld [vmem:[%s4 + $0xf8] sm:$0xff]
      %1212 = vset.pattern.permute.xlu0 0
      %1213 = vperm.xlu0 %1212, %v1179
      %v1214 = vpop.permute.xlu0 %1213
      %1217 = vset.pattern.permute.xlu0 0
      %1218 = vperm.xlu0 %1217, %v1180
      %v1219 = vpop.permute.xlu0 %1218
      %1222 = vset.pattern.permute.xlu0 0
      %1223 = vperm.xlu0 %1222, %v1181
      %v1224 = vpop.permute.xlu0 %1223
      %1227 = vset.pattern.permute.xlu0 0
      %1228 = vperm.xlu0 %1227, %v1182
      %v1229 = vpop.permute.xlu0 %1228
      %1232 = vset.pattern.permute.xlu0 0
      %1233 = vperm.xlu0 %1232, %v1183
      %v1234 = vpop.permute.xlu0 %1233
      %1237 = vset.pattern.permute.xlu0 0
      %1238 = vperm.xlu0 %1237, %v1184
      %v1239 = vpop.permute.xlu0 %1238
      %1242 = vset.pattern.permute.xlu0 0
      %1243 = vperm.xlu0 %1242, %v1185
      %v1244 = vpop.permute.xlu0 %1243
      %1247 = vset.pattern.permute.xlu0 0
      %1248 = vperm.xlu0 %1247, %v1186
      %v1249 = vpop.permute.xlu0 %1248
      %1252 = vset.pattern.permute.xlu0 0
      %1253 = vperm.xlu0 %1252, %v1187
      %v1254 = vpop.permute.xlu0 %1253
      %1257 = vset.pattern.permute.xlu0 0
      %1258 = vperm.xlu0 %1257, %v1188
      %v1259 = vpop.permute.xlu0 %1258
      %1262 = vset.pattern.permute.xlu0 0
      %1263 = vperm.xlu0 %1262, %v1189
      %v1264 = vpop.permute.xlu0 %1263
      %1267 = vset.pattern.permute.xlu0 0
      %1268 = vperm.xlu0 %1267, %v1190
      %v1269 = vpop.permute.xlu0 %1268
      %1272 = vset.pattern.permute.xlu0 0
      %1273 = vperm.xlu0 %1272, %v1191
      %v1274 = vpop.permute.xlu0 %1273
      %1277 = vset.pattern.permute.xlu0 0
      %1278 = vperm.xlu0 %1277, %v1192
      %v1279 = vpop.permute.xlu0 %1278
      %1282 = vset.pattern.permute.xlu0 0
      %1283 = vperm.xlu0 %1282, %v1193
      %v1284 = vpop.permute.xlu0 %1283
      %1287 = vset.pattern.permute.xlu0 0
      %1288 = vperm.xlu0 %1287, %v1194
      %v1289 = vpop.permute.xlu0 %1288
      %1292 = vset.pattern.permute.xlu0 0
      %1293 = vperm.xlu0 %1292, %v1195
      %v1294 = vpop.permute.xlu0 %1293
      %1297 = vset.pattern.permute.xlu0 0
      %1298 = vperm.xlu0 %1297, %v1196
      %v1299 = vpop.permute.xlu0 %1298
      %1302 = vset.pattern.permute.xlu0 0
      %1303 = vperm.xlu0 %1302, %v1197
      %v1304 = vpop.permute.xlu0 %1303
      %1307 = vset.pattern.permute.xlu0 0
      %1308 = vperm.xlu0 %1307, %v1198
      %v1309 = vpop.permute.xlu0 %1308
      %1312 = vset.pattern.permute.xlu0 0
      %1313 = vperm.xlu0 %1312, %v1199
      %v1314 = vpop.permute.xlu0 %1313
      %1317 = vset.pattern.permute.xlu0 0
      %1318 = vperm.xlu0 %1317, %v1200
      %v1319 = vpop.permute.xlu0 %1318
      %1322 = vset.pattern.permute.xlu0 0
      %1323 = vperm.xlu0 %1322, %v1201
      %v1324 = vpop.permute.xlu0 %1323
      %1327 = vset.pattern.permute.xlu0 0
      %1328 = vperm.xlu0 %1327, %v1202
      %v1329 = vpop.permute.xlu0 %1328
      %1332 = vset.pattern.permute.xlu0 0
      %1333 = vperm.xlu0 %1332, %v1203
      %v1334 = vpop.permute.xlu0 %1333
      %1337 = vset.pattern.permute.xlu0 0
      %1338 = vperm.xlu0 %1337, %v1204
      %v1339 = vpop.permute.xlu0 %1338
      %1342 = vset.pattern.permute.xlu0 0
      %1343 = vperm.xlu0 %1342, %v1205
      %v1344 = vpop.permute.xlu0 %1343
      %1347 = vset.pattern.permute.xlu0 0
      %1348 = vperm.xlu0 %1347, %v1206
      %v1349 = vpop.permute.xlu0 %1348
      %1352 = vset.pattern.permute.xlu0 0
      %1353 = vperm.xlu0 %1352, %v1207
      %v1354 = vpop.permute.xlu0 %1353
      %1357 = vset.pattern.permute.xlu0 0
      %1358 = vperm.xlu0 %1357, %v1208
      %v1359 = vpop.permute.xlu0 %1358
      %1362 = vset.pattern.permute.xlu0 0
      %1363 = vperm.xlu0 %1362, %v1209
      %v1364 = vpop.permute.xlu0 %1363
      %1367 = vset.pattern.permute.xlu0 0
      %1368 = vperm.xlu0 %1367, %v1210
      %v1369 = vpop.permute.xlu0 %1368
      %v1403 = vunpack.c.l.b16 %v1131
      %v1404 = vunpack.c.h.b16 %v1131
      %v1405 = vunpack.c.l.b16 %v1132
      %v1406 = vunpack.c.h.b16 %v1132
      %v1407 = vunpack.c.l.b16 %v1133
      %v1408 = vunpack.c.h.b16 %v1133
      %v1409 = vunpack.c.l.b16 %v1134
      %v1410 = vunpack.c.h.b16 %v1134
      %v1411 = vunpack.c.l.b16 %v1135
      %v1412 = vunpack.c.h.b16 %v1135
      %v1413 = vunpack.c.l.b16 %v1136
      %v1414 = vunpack.c.h.b16 %v1136
      %v1415 = vunpack.c.l.b16 %v1137
      %v1416 = vunpack.c.h.b16 %v1137
      %v1417 = vunpack.c.l.b16 %v1138
      %v1418 = vunpack.c.h.b16 %v1138
      %v1419 = vunpack.c.l.b16 %v1139
      %v1420 = vunpack.c.h.b16 %v1139
      %v1421 = vunpack.c.l.b16 %v1140
      %v1422 = vunpack.c.h.b16 %v1140
      %v1423 = vunpack.c.l.b16 %v1141
      %v1424 = vunpack.c.h.b16 %v1141
      %v1425 = vunpack.c.l.b16 %v1142
      %v1426 = vunpack.c.h.b16 %v1142
      %v1427 = vunpack.c.l.b16 %v1143
      %v1428 = vunpack.c.h.b16 %v1143
      %v1429 = vunpack.c.l.b16 %v1144
      %v1430 = vunpack.c.h.b16 %v1144
      %v1431 = vunpack.c.l.b16 %v1145
      %v1432 = vunpack.c.h.b16 %v1145
      %v1433 = vunpack.c.l.b16 %v1146
      %v1434 = vunpack.c.h.b16 %v1146
      %v1435 = vunpack.c.l.b16 %v1147
      %v1436 = vunpack.c.h.b16 %v1147
      %v1437 = vunpack.c.l.b16 %v1148
      %v1438 = vunpack.c.h.b16 %v1148
      %v1439 = vunpack.c.l.b16 %v1149
      %v1440 = vunpack.c.h.b16 %v1149
      %v1441 = vunpack.c.l.b16 %v1150
      %v1442 = vunpack.c.h.b16 %v1150
      %v1443 = vunpack.c.l.b16 %v1151
      %v1444 = vunpack.c.h.b16 %v1151
      %v1445 = vunpack.c.l.b16 %v1152
      %v1446 = vunpack.c.h.b16 %v1152
      %v1447 = vunpack.c.l.b16 %v1153
      %v1448 = vunpack.c.h.b16 %v1153
      %v1449 = vunpack.c.l.b16 %v1154
      %v1450 = vunpack.c.h.b16 %v1154
      %v1451 = vunpack.c.l.b16 %v1155
      %v1452 = vunpack.c.h.b16 %v1155
      %v1453 = vunpack.c.l.b16 %v1156
      %v1454 = vunpack.c.h.b16 %v1156
      %v1455 = vunpack.c.l.b16 %v1157
      %v1456 = vunpack.c.h.b16 %v1157
      %v1457 = vunpack.c.l.b16 %v1158
      %v1458 = vunpack.c.h.b16 %v1158
      %v1459 = vunpack.c.l.b16 %v1159
      %v1460 = vunpack.c.h.b16 %v1159
      %v1461 = vunpack.c.l.b16 %v1160
      %v1462 = vunpack.c.h.b16 %v1160
      %v1463 = vunpack.c.l.b16 %v1161
      %v1464 = vunpack.c.h.b16 %v1161
      %v1465 = vunpack.c.l.b16 %v1162
      %v1466 = vunpack.c.h.b16 %v1162
      %v1467 = vpack.c.b16 %v1405, %v1403
      %v1468 = vpack.c.b16 %v1406, %v1404
      %v1469 = vpack.c.b16 %v1409, %v1407
      %v1470 = vpack.c.b16 %v1410, %v1408
      %v1471 = vpack.c.b16 %v1413, %v1411
      %v1472 = vpack.c.b16 %v1414, %v1412
      %v1473 = vpack.c.b16 %v1417, %v1415
      %v1474 = vpack.c.b16 %v1418, %v1416
      %v1475 = vpack.c.b16 %v1421, %v1419
      %v1476 = vpack.c.b16 %v1422, %v1420
      %v1477 = vpack.c.b16 %v1425, %v1423
      %v1478 = vpack.c.b16 %v1426, %v1424
      %v1479 = vpack.c.b16 %v1429, %v1427
      %v1480 = vpack.c.b16 %v1430, %v1428
      %v1481 = vpack.c.b16 %v1433, %v1431
      %v1482 = vpack.c.b16 %v1434, %v1432
      %v1483 = vpack.c.b16 %v1437, %v1435
      %v1484 = vpack.c.b16 %v1438, %v1436
      %v1485 = vpack.c.b16 %v1441, %v1439
      %v1486 = vpack.c.b16 %v1442, %v1440
      %v1487 = vpack.c.b16 %v1445, %v1443
      %v1488 = vpack.c.b16 %v1446, %v1444
      %v1489 = vpack.c.b16 %v1449, %v1447
      %v1490 = vpack.c.b16 %v1450, %v1448
      %v1491 = vpack.c.b16 %v1453, %v1451
      %v1492 = vpack.c.b16 %v1454, %v1452
      %v1493 = vpack.c.b16 %v1457, %v1455
      %v1494 = vpack.c.b16 %v1458, %v1456
      %v1495 = vpack.c.b16 %v1461, %v1459
      %v1496 = vpack.c.b16 %v1462, %v1460
      %v1497 = vpack.c.b16 %v1465, %v1463
      %v1498 = vpack.c.b16 %v1466, %v1464
      %1531 = vmatprep.subr.bf16.mxu0 0
      %1532 = vmatpush1.bf16.msra.mxu0 %v1170
      %1533 = vmatprep.subr.bf16.mxu0 0
      %1534 = vmatpush1.bf16.msra.mxu0 %v1169
      %1535 = vmatprep.subr.bf16.mxu0 0
      %1536 = vmatpush1.bf16.msra.mxu0 %v1168
      %1537 = vmatprep.subr.bf16.mxu0 0
      %1538 = vmatpush1.bf16.msra.mxu0 %v1167
      %1539 = vmatprep.subr.bf16.mxu0 0
      %1540 = vmatpush1.bf16.msra.mxu0 %v1166
      %1541 = vmatprep.subr.bf16.mxu0 0
      %1542 = vmatpush1.bf16.msra.mxu0 %v1165
      %1543 = vmatprep.subr.bf16.mxu0 0
      %1544 = vmatpush1.bf16.msra.mxu0 %v1164
      %1545 = vmatprep.subr.bf16.mxu0 0
      %1546 = vmatpush1.bf16.msra.mxu0 %v1163
      %1547 = vmatprep.subr.bf16.mxu0 0
      %1548 = vmatpush2.bf16.msra.mxu0 %v1178
      %1549 = vmatprep.subr.bf16.mxu0 0
      %1550 = vmatpush2.bf16.msra.mxu0 %v1177
      %1551 = vmatprep.subr.bf16.mxu0 0
      %1552 = vmatpush2.bf16.msra.mxu0 %v1176
      %1553 = vmatprep.subr.bf16.mxu0 0
      %1554 = vmatpush2.bf16.msra.mxu0 %v1175
      %1555 = vmatprep.subr.bf16.mxu0 0
      %1556 = vmatpush2.bf16.msra.mxu0 %v1174
      %1557 = vmatprep.subr.bf16.mxu0 0
      %1558 = vmatpush2.bf16.msra.mxu0 %v1173
      %1559 = vmatprep.subr.bf16.mxu0 0
      %1560 = vmatpush2.bf16.msra.mxu0 %v1172
      %1561 = vmatprep.subr.bf16.mxu0 0
      %1562 = vmatpush2.bf16.msra.mxu0 %v1171
      %1563 = vmatprep.mubr.bf16.mxu0 %v1468
      %1564 = vmatmul.mubr.bf16.gmra.mxu0 %v1467
      %v1565 = vpop.f32.mrf.mxu0
      %v1566 = vadd.f32 %v1214, %v1565
      %v1567 = vpop.f32.mrf.mxu0
      %v1568 = vpop.f32.mrf.mxu0
      %v1569 = vadd.f32 %v1219, %v1568
      %v1570 = vpop.f32.mrf.mxu0
      %1571 = vmatprep.mubr.bf16.mxu0 %v1470
      %1572 = vmatmul.mubr.bf16.gmra.mxu0 %v1469
      %v1573 = vpop.f32.mrf.mxu0
      %v1574 = vadd.f32 %v1224, %v1573
      %v1575 = vpop.f32.mrf.mxu0
      %v1576 = vpop.f32.mrf.mxu0
      %v1577 = vadd.f32 %v1229, %v1576
      %v1578 = vpop.f32.mrf.mxu0
      %1579 = vmatprep.mubr.bf16.mxu0 %v1472
      %1580 = vmatmul.mubr.bf16.gmra.mxu0 %v1471
      %v1581 = vpop.f32.mrf.mxu0
      %v1582 = vadd.f32 %v1234, %v1581
      %v1583 = vpop.f32.mrf.mxu0
      %v1584 = vpop.f32.mrf.mxu0
      %v1585 = vadd.f32 %v1239, %v1584
      %v1586 = vpop.f32.mrf.mxu0
      %1587 = vmatprep.mubr.bf16.mxu0 %v1474
      %1588 = vmatmul.mubr.bf16.gmra.mxu0 %v1473
      %v1589 = vpop.f32.mrf.mxu0
      %v1590 = vadd.f32 %v1244, %v1589
      %v1591 = vpop.f32.mrf.mxu0
      %v1592 = vpop.f32.mrf.mxu0
      %v1593 = vadd.f32 %v1249, %v1592
      %v1594 = vpop.f32.mrf.mxu0
      %1595 = vmatprep.mubr.bf16.mxu0 %v1476
      %1596 = vmatmul.mubr.bf16.gmra.mxu0 %v1475
      %v1597 = vpop.f32.mrf.mxu0
      %v1598 = vadd.f32 %v1254, %v1597
      %v1599 = vpop.f32.mrf.mxu0
      %v1600 = vpop.f32.mrf.mxu0
      %v1601 = vadd.f32 %v1259, %v1600
      %v1602 = vpop.f32.mrf.mxu0
      %1603 = vmatprep.mubr.bf16.mxu0 %v1478
      %1604 = vmatmul.mubr.bf16.gmra.mxu0 %v1477
      %v1605 = vpop.f32.mrf.mxu0
      %v1606 = vadd.f32 %v1264, %v1605
      %v1607 = vpop.f32.mrf.mxu0
      %v1608 = vpop.f32.mrf.mxu0
      %v1609 = vadd.f32 %v1269, %v1608
      %v1610 = vpop.f32.mrf.mxu0
      %1611 = vmatprep.mubr.bf16.mxu0 %v1480
      %1612 = vmatmul.mubr.bf16.gmra.mxu0 %v1479
      %v1613 = vpop.f32.mrf.mxu0
      %v1614 = vadd.f32 %v1274, %v1613
      %v1615 = vpop.f32.mrf.mxu0
      %v1616 = vpop.f32.mrf.mxu0
      %v1617 = vadd.f32 %v1279, %v1616
      %v1618 = vpop.f32.mrf.mxu0
      %1619 = vmatprep.mubr.bf16.mxu0 %v1482
      %1620 = vmatmul.mubr.bf16.gmra.mxu0 %v1481
      %v1621 = vpop.f32.mrf.mxu0
      %v1622 = vadd.f32 %v1284, %v1621
      %v1623 = vpop.f32.mrf.mxu0
      %v1624 = vpop.f32.mrf.mxu0
      %v1625 = vadd.f32 %v1289, %v1624
      %v1626 = vpop.f32.mrf.mxu0
      %1627 = vmatprep.mubr.bf16.mxu0 %v1484
      %1628 = vmatmul.mubr.bf16.gmra.mxu0 %v1483
      %v1629 = vpop.f32.mrf.mxu0
      %v1630 = vadd.f32 %v1294, %v1629
      %v1631 = vpop.f32.mrf.mxu0
      %v1632 = vpop.f32.mrf.mxu0
      %v1633 = vadd.f32 %v1299, %v1632
      %v1634 = vpop.f32.mrf.mxu0
      %1635 = vmatprep.mubr.bf16.mxu0 %v1486
      %1636 = vmatmul.mubr.bf16.gmra.mxu0 %v1485
      %v1637 = vpop.f32.mrf.mxu0
      %v1638 = vadd.f32 %v1304, %v1637
      %v1639 = vpop.f32.mrf.mxu0
      %v1640 = vpop.f32.mrf.mxu0
      %v1641 = vadd.f32 %v1309, %v1640
      %v1642 = vpop.f32.mrf.mxu0
      %1643 = vmatprep.mubr.bf16.mxu0 %v1488
      %1644 = vmatmul.mubr.bf16.gmra.mxu0 %v1487
      %v1645 = vpop.f32.mrf.mxu0
      %v1646 = vadd.f32 %v1314, %v1645
      %v1647 = vpop.f32.mrf.mxu0
      %v1648 = vpop.f32.mrf.mxu0
      %v1649 = vadd.f32 %v1319, %v1648
      %v1650 = vpop.f32.mrf.mxu0
      %1651 = vmatprep.mubr.bf16.mxu0 %v1490
      %1652 = vmatmul.mubr.bf16.gmra.mxu0 %v1489
      %v1653 = vpop.f32.mrf.mxu0
      %v1654 = vadd.f32 %v1324, %v1653
      %v1655 = vpop.f32.mrf.mxu0
      %v1656 = vpop.f32.mrf.mxu0
      %v1657 = vadd.f32 %v1329, %v1656
      %v1658 = vpop.f32.mrf.mxu0
      %1659 = vmatprep.mubr.bf16.mxu0 %v1492
      %1660 = vmatmul.mubr.bf16.gmra.mxu0 %v1491
      %v1661 = vpop.f32.mrf.mxu0
      %v1662 = vadd.f32 %v1334, %v1661
      %v1663 = vpop.f32.mrf.mxu0
      %v1664 = vpop.f32.mrf.mxu0
      %v1665 = vadd.f32 %v1339, %v1664
      %v1666 = vpop.f32.mrf.mxu0
      %1667 = vmatprep.mubr.bf16.mxu0 %v1494
      %1668 = vmatmul.mubr.bf16.gmra.mxu0 %v1493
      %v1669 = vpop.f32.mrf.mxu0
      %v1670 = vadd.f32 %v1344, %v1669
      %v1671 = vpop.f32.mrf.mxu0
      %v1672 = vpop.f32.mrf.mxu0
      %v1673 = vadd.f32 %v1349, %v1672
      %v1674 = vpop.f32.mrf.mxu0
      %1675 = vmatprep.mubr.bf16.mxu0 %v1496
      %1676 = vmatmul.mubr.bf16.gmra.mxu0 %v1495
      %v1677 = vpop.f32.mrf.mxu0
      %v1678 = vadd.f32 %v1354, %v1677
      %v1679 = vpop.f32.mrf.mxu0
      %v1680 = vpop.f32.mrf.mxu0
      %v1681 = vadd.f32 %v1359, %v1680
      %v1682 = vpop.f32.mrf.mxu0
      %1683 = vmatprep.mubr.bf16.mxu0 %v1498
      %1684 = vmatmul.mubr.bf16.gmra.mxu0 %v1497
      %v1685 = vpop.f32.mrf.mxu0
      %v1686 = vadd.f32 %v1364, %v1685
      %v1687 = vpop.f32.mrf.mxu0
      %v1688 = vpop.f32.mrf.mxu0
      %v1689 = vadd.f32 %v1369, %v1688
      %v1690 = vpop.f32.mrf.mxu0
      %1691 = vdwg.mxu0
      %v1692 = vpack.c.bf16 %v1569, %v1566
      %v1693 = vpack.c.bf16 %v1577, %v1574
      %v1694 = vpack.c.bf16 %v1585, %v1582
      %v1695 = vpack.c.bf16 %v1593, %v1590
      %v1696 = vpack.c.bf16 %v1601, %v1598
      %v1697 = vpack.c.bf16 %v1609, %v1606
      %v1698 = vpack.c.bf16 %v1617, %v1614
      %v1699 = vpack.c.bf16 %v1625, %v1622
      %v1700 = vpack.c.bf16 %v1633, %v1630
      %v1701 = vpack.c.bf16 %v1641, %v1638
      %v1702 = vpack.c.bf16 %v1649, %v1646
      %v1703 = vpack.c.bf16 %v1657, %v1654
      %v1704 = vpack.c.bf16 %v1665, %v1662
      %v1705 = vpack.c.bf16 %v1673, %v1670
      %v1706 = vpack.c.bf16 %v1681, %v1678
      %v1707 = vpack.c.bf16 %v1689, %v1686
      %v1724 = vunpack.c.l.b16 %v1692
      %v1725 = vunpack.c.h.b16 %v1692
      %v1726 = vunpack.c.l.b16 %v1693
      %v1727 = vunpack.c.h.b16 %v1693
      %v1728 = vunpack.c.l.b16 %v1694
      %v1729 = vunpack.c.h.b16 %v1694
      %v1730 = vunpack.c.l.b16 %v1695
      %v1731 = vunpack.c.h.b16 %v1695
      %v1732 = vunpack.c.l.b16 %v1696
      %v1733 = vunpack.c.h.b16 %v1696
      %v1734 = vunpack.c.l.b16 %v1697
      %v1735 = vunpack.c.h.b16 %v1697
      %v1736 = vunpack.c.l.b16 %v1698
      %v1737 = vunpack.c.h.b16 %v1698
      %v1738 = vunpack.c.l.b16 %v1699
      %v1739 = vunpack.c.h.b16 %v1699
      %v1740 = vunpack.c.l.b16 %v1700
      %v1741 = vunpack.c.h.b16 %v1700
      %v1742 = vunpack.c.l.b16 %v1701
      %v1743 = vunpack.c.h.b16 %v1701
      %v1744 = vunpack.c.l.b16 %v1702
      %v1745 = vunpack.c.h.b16 %v1702
      %v1746 = vunpack.c.l.b16 %v1703
      %v1747 = vunpack.c.h.b16 %v1703
      %v1748 = vunpack.c.l.b16 %v1704
      %v1749 = vunpack.c.h.b16 %v1704
      %v1750 = vunpack.c.l.b16 %v1705
      %v1751 = vunpack.c.h.b16 %v1705
      %v1752 = vunpack.c.l.b16 %v1706
      %v1753 = vunpack.c.h.b16 %v1706
      %v1754 = vunpack.c.l.b16 %v1707
      %v1755 = vunpack.c.h.b16 %v1707
      %v1756 = vpack.c.b16 %v1724, %v1724
      %v1757 = vpack.c.b16 %v1725, %v1725
      %v1758 = vpack.c.b16 %v1726, %v1726
      %v1759 = vpack.c.b16 %v1727, %v1727
      %v1760 = vpack.c.b16 %v1728, %v1728
      %v1761 = vpack.c.b16 %v1729, %v1729
      %v1762 = vpack.c.b16 %v1730, %v1730
      %v1763 = vpack.c.b16 %v1731, %v1731
      %v1764 = vpack.c.b16 %v1732, %v1732
      %v1765 = vpack.c.b16 %v1733, %v1733
      %v1766 = vpack.c.b16 %v1734, %v1734
      %v1767 = vpack.c.b16 %v1735, %v1735
      %v1768 = vpack.c.b16 %v1736, %v1736
      %v1769 = vpack.c.b16 %v1737, %v1737
      %v1770 = vpack.c.b16 %v1738, %v1738
      %v1771 = vpack.c.b16 %v1739, %v1739
      %v1772 = vpack.c.b16 %v1740, %v1740
      %v1773 = vpack.c.b16 %v1741, %v1741
      %v1774 = vpack.c.b16 %v1742, %v1742
      %v1775 = vpack.c.b16 %v1743, %v1743
      %v1776 = vpack.c.b16 %v1744, %v1744
      %v1777 = vpack.c.b16 %v1745, %v1745
      %v1778 = vpack.c.b16 %v1746, %v1746
      %v1779 = vpack.c.b16 %v1747, %v1747
      %v1780 = vpack.c.b16 %v1748, %v1748
      %v1781 = vpack.c.b16 %v1749, %v1749
      %v1782 = vpack.c.b16 %v1750, %v1750
      %v1783 = vpack.c.b16 %v1751, %v1751
      %v1784 = vpack.c.b16 %v1752, %v1752
      %v1785 = vpack.c.b16 %v1753, %v1753
      %v1786 = vpack.c.b16 %v1754, %v1754
      %v1787 = vpack.c.b16 %v1755, %v1755
      %1820 = vst [vmem:[%s252] sm:$0xf] %v1756
      %1821 = vst [vmem:[%s252 + $0x4] sm:$0xf] %v1757
      %1822 = vst [vmem:[%s252 + $0x8] sm:$0xf] %v1758
      %1823 = vst [vmem:[%s252 + $0xc] sm:$0xf] %v1759
      %1824 = vst [vmem:[%s252 + $0x10] sm:$0xf] %v1760
      %1825 = vst [vmem:[%s252 + $0x14] sm:$0xf] %v1761
      %1826 = vst [vmem:[%s252 + $0x18] sm:$0xf] %v1762
      %1827 = vst [vmem:[%s252 + $0x1c] sm:$0xf] %v1763
      %1828 = vst [vmem:[%s252 + $0x20] sm:$0xf] %v1764
      %1829 = vst [vmem:[%s252 + $0x24] sm:$0xf] %v1765
      %1830 = vst [vmem:[%s252 + $0x28] sm:$0xf] %v1766
      %1831 = vst [vmem:[%s252 + $0x2c] sm:$0xf] %v1767
      %1832 = vst [vmem:[%s252 + $0x30] sm:$0xf] %v1768
      %1833 = vst [vmem:[%s252 + $0x34] sm:$0xf] %v1769
      %1834 = vst [vmem:[%s252 + $0x38] sm:$0xf] %v1770
      %1835 = vst [vmem:[%s252 + $0x3c] sm:$0xf] %v1771
      %1836 = vst [vmem:[%s252 + $0x40] sm:$0xf] %v1772
      %1837 = vst [vmem:[%s252 + $0x44] sm:$0xf] %v1773
      %1838 = vst [vmem:[%s252 + $0x48] sm:$0xf] %v1774
      %1839 = vst [vmem:[%s252 + $0x4c] sm:$0xf] %v1775
      %1840 = vst [vmem:[%s252 + $0x50] sm:$0xf] %v1776
      %1841 = vst [vmem:[%s252 + $0x54] sm:$0xf] %v1777
      %1842 = vst [vmem:[%s252 + $0x58] sm:$0xf] %v1778
      %1843 = vst [vmem:[%s252 + $0x5c] sm:$0xf] %v1779
      %1844 = vst [vmem:[%s252 + $0x60] sm:$0xf] %v1780
      %1845 = vst [vmem:[%s252 + $0x64] sm:$0xf] %v1781
      %1846 = vst [vmem:[%s252 + $0x68] sm:$0xf] %v1782
      %1847 = vst [vmem:[%s252 + $0x6c] sm:$0xf] %v1783
      %1848 = vst [vmem:[%s252 + $0x70] sm:$0xf] %v1784
      %1849 = vst [vmem:[%s252 + $0x74] sm:$0xf] %v1785
      %1850 = vst [vmem:[%s252 + $0x78] sm:$0xf] %v1786
      %1851 = vst [vmem:[%s252 + $0x7c] sm:$0xf] %v1787
      %p1852 = scmp.lt.s32.totalorder %s20, 1
      %s1853 = scalar_select %p1852, %s20, 1
      %p1854 = scmp.lt.s32.totalorder %s21, 0
      %s1855 = scalar_select %p1854, %s21, 0
      %s1856 = smul.addr %s1853, 32
      %s1857 = sadd.s32 %s1855, %s1856
      %s1858 = smul.addr %s1857, 4
      %s1859 = scalar_lea.vmem %s5, %s1858
      // Predicated region
      $region41: #{position_embedding_learned.1} parent=39 // pred_check
        %p1860 = pneg %p160
      $region42: #{position_embedding_learned.1} parent=39 // pred_check_branch
        %1862 = sbr.rel (%p1860) target = $region44
      $region43: #{position_embedding_learned.1} parent=39 // pred_region
        _
      $region44: #{position_embedding_learned.1} parent=39 // pred_fallthru
        _
    $region40: #{position_embedding_learned.1} parent=5 // pred_fallthru
      _
    %p1863 = scmp.le.s32.totalorder 2, %s11
    // Predicated region
    $region45: #{position_embedding_learned.1} parent=5 // pred_check
      %p1864 = pneg %p1863
    $region46: #{position_embedding_learned.1} parent=5 // pred_check_branch
      %1866 = sbr.rel (%p1864) target = $region48
    $region47: #{position_embedding_learned.1} parent=5 // pred_region
      %s1867 = ssub.s32 %s11, 2
      // Predicated region
      $region49: #{position_embedding_learned.1} parent=47 // pred_check
        %p1868 = pneg %p166
      $region50: #{position_embedding_learned.1} parent=47 // pred_check_branch
        %1870 = sbr.rel (%p1868) target = $region52
      $region51: #{position_embedding_learned.1} parent=47 // pred_region
        %p1871 = scmp.lt.s32.totalorder %s22, 1
        %s1872 = scalar_select %p1871, %s22, 1
        %p1873 = scmp.lt.s32.totalorder %s23, 0
        %s1874 = scalar_select %p1873, %s23, 0
        %s1875 = smul.addr %s1872, 32
        %s1876 = sadd.s32 %s1874, %s1875
        %s1877 = smul.addr %s1876, 4
        %s1878 = scalar_lea.vmem %s5, %s1877
      $region52: #{position_embedding_learned.1} parent=47 // pred_fallthru
        _
    $region48: #{position_embedding_learned.1} parent=5 // pred_fallthru
      _
  $region6: #{position_embedding_learned.1} parent=0 // loop_footer
    %s15 = sadd.s32 1, %s11
  $region7: #{position_embedding_learned.1} parent=0 // loop_footer_branch
    %10 = sbr.rel target = $region3
  $region8: #{position_embedding_learned.1} parent=0 // loop_exit
    _

</llo_original>
